<compile_context>
chip_gen: v7x
topology: tpu7x:2x2x1
jax: 0.10.0
libtpu: 0.0.40
codegen_flags: <defaults>
</compile_context>

<pallas_src>
import jax
import jax.numpy as jnp
from jax.experimental import pallas as pl
from jax.experimental.pallas import tpu as pltpu

EPS = 1e-5


# ----------------------------------------------------------------------------
# Fused decoder-layer kernel: lightconv -> cross-MHA -> MLP (Bb batches / step)
# ----------------------------------------------------------------------------
def _make_decoder_kernel(*, Bb, T, Tk, C, K, dil, n_heads, head_dim, has_mask):
    BT = Bb * T

    def kernel(*refs):
        if has_mask:
            (x_ref, enc_ref, mask_ref, wc_ref, cg_ref, cb_ref,
             wq_ref, bq_ref, wkv_ref, bkv_ref, wo_ref, bo_ref, ag_ref, ab_ref,
             w1_ref, b1_ref, w2_ref, b2_ref, mg_ref, mb_ref, o_ref) = refs
        else:
            (x_ref, enc_ref, wc_ref, cg_ref, cb_ref,
             wq_ref, bq_ref, wkv_ref, bkv_ref, wo_ref, bo_ref, ag_ref, ab_ref,
             w1_ref, b1_ref, w2_ref, b2_ref, mg_ref, mb_ref, o_ref) = refs
            mask_ref = None

        def layer_norm(y, g_ref, b_ref):
            mu = jnp.mean(y, axis=-1, keepdims=True)
            var = jnp.mean((y - mu) ** 2, axis=-1, keepdims=True)
            return (y - mu) * jax.lax.rsqrt(var + EPS) * g_ref[...] + b_ref[...]

        # ------------------ Stage 1: LightConv (causal depthwise) -----------
        # Row-folded slab: rows are (batch-in-block, time); leading-dim merge
        # is layout-free (T is a multiple of the 8-sublane tile).
        x = x_ref[...].astype(jnp.float32).reshape(BT, C)
        wc = wc_ref[...].astype(jnp.float32)                     # (K, C)
        # In-batch time index of every row (hoisted; no int modulo needed).
        tpos = jax.lax.broadcasted_iota(jnp.int32, (Bb, T, C), 1).reshape(BT, C)

        acc = jnp.zeros_like(x)
        # y[t, c] = sum_k wc[k, c] * x[t - (K-1-k)*dil, c]  (causal, zero halo)
        for k in range(K):
            s = (K - 1 - k) * dil
            if s >= T:
                continue
            if s == 0:
                xs = x
            else:
                # roll over the whole slab: rows that would bleed across the
                # batch boundary have tpos < s and are masked to zero anyway.
                xs = pltpu.roll(x, shift=s, axis=0)
                xs = jnp.where(tpos >= s, xs, 0.0)
            acc = acc + wc[k:k + 1, :] * xs
        y1 = layer_norm(x + acc, cg_ref, cb_ref)                 # (BT, C) f32

        # ------------------ Stage 2: cross-attention MHA ---------------------
        y1b = y1.astype(jnp.bfloat16)
        encb = enc_ref[...].astype(jnp.bfloat16).reshape(Bb * Tk, C)

        q = jnp.dot(y1b, wq_ref[...],
                    preferred_element_type=jnp.float32) + bq_ref[...]
        kv = jnp.dot(encb, wkv_ref[...],                          # fused K|V
                     preferred_element_type=jnp.float32) + bkv_ref[...]

        scale = 1.0 / (head_dim ** 0.5)
        qb = (q * scale).astype(jnp.bfloat16).reshape(Bb, T, C)   # cast once
        kb = kv[:, :C].astype(jnp.bfloat16).reshape(Bb, Tk, C)
        vb = kv[:, C:].astype(jnp.bfloat16).reshape(Bb, Tk, C)
        if has_mask:
            maskb = mask_ref[...].astype(jnp.float32)[None, :, :]

        # Bb-batched per-head attention; contexts stay in registers and are
        # written once as a full-width value (no VMEM scratch, no 8-lane
        # masked stores).
        ctx_parts = []
        for h in range(n_heads):                                  # small, static
            lo = h * head_dim
            qh = qb[:, :, lo:lo + head_dim]
            kh = kb[:, :, lo:lo + head_dim]
            vh = vb[:, :, lo:lo + head_dim]
            sc = jnp.einsum("bqd,bkd->bqk", qh, kh,
                            preferred_element_type=jnp.float32)   # (Bb, T, Tk)
            if has_mask:
                sc = sc + maskb
            sc = sc - jnp.max(sc, axis=-1, keepdims=True)
            p = jnp.exp(sc)
            p = p * pl.reciprocal(jnp.sum(p, axis=-1, keepdims=True),
                                  approx=True)
            ctx_parts.append(
                jnp.einsum("bqk,bkd->bqd", p.astype(jnp.bfloat16), vh,
                           preferred_element_type=jnp.float32))
        ctx = jnp.concatenate(ctx_parts, axis=-1).reshape(BT, C)

        attn = jnp.dot(ctx.astype(jnp.bfloat16), wo_ref[...],
                       preferred_element_type=jnp.float32) + bo_ref[...]
        y2 = layer_norm(y1 + attn, ag_ref, ab_ref)                # dropout == id

        # ------------------ Stage 3: MLP -------------------------------------
        h1 = jnp.dot(y2.astype(jnp.bfloat16), w1_ref[...],
                     preferred_element_type=jnp.float32) + b1_ref[...]
        h1 = jnp.maximum(h1, 0.0)                                 # ReLU
        h2 = jnp.dot(h1.astype(jnp.bfloat16), w2_ref[...],
                     preferred_element_type=jnp.float32) + b2_ref[...]
        y3 = layer_norm(y2 + h2, mg_ref, mb_ref)                  # dropout == id

        o_ref[...] = y3.reshape(Bb, T, C).astype(o_ref.dtype)

    return kernel


# ----------------------------------------------------------------------------
# Wrapper
# ----------------------------------------------------------------------------
def _pick_batch_block(B, T, row_target=256):
    """Largest divisor of B with Bb*T <= row_target, keeping >=2 grid blocks
    when B >= 2 so a dual-TensorCore chip (v7x) can shard the batch axis."""
    best = 1
    for bb in range(1, B + 1):
        if B % bb == 0 and bb * T <= row_target:
            best = bb
    if B >= 2 and best == B:
        for bb in range(best - 1, 0, -1):
            if B % bb == 0:
                best = bb
                break
    return best


def light_conv_decoder_layer(x, encoder_out, params, *, n_heads, kernel_size,
                             dilation=None, attn_mask=None, batch_block=None):
    B, T, C = x.shape
    Tk = encoder_out.shape[1]
    F = params["mlp"]["w1"].shape[1]
    head_dim = C // n_heads
    dil = 1 if dilation is None else dilation
    has_mask = attn_mask is not None
    Bb = batch_block if batch_block is not None else _pick_batch_block(B, T)
    assert B % Bb == 0

    conv, mha, mlp = params["conv"], params["mha"], params["mlp"]

    # Parameter prep (glue): softmax over taps, expand per-head -> per-channel.
    w_sm = jax.nn.softmax(conv["w"].astype(jnp.float32), axis=-1)   # (H, K)
    wc = jnp.repeat(w_sm, C // n_heads, axis=0).T                   # (K, C)

    bf = lambda a: a.astype(jnp.bfloat16)           # bf16 MXU weights
    wkv = bf(jnp.concatenate([mha["wk"], mha["wv"]], axis=1))       # (C, 2C)
    bkv = jnp.concatenate([mha["bk"], mha["bv"]], axis=1)           # (1, 2C)

    full2d = lambda shape: pl.BlockSpec(shape, lambda b: (0, 0))

    in_specs = [
        pl.BlockSpec((Bb, T, C), lambda b: (b, 0, 0)),     # x
        pl.BlockSpec((Bb, Tk, C), lambda b: (b, 0, 0)),    # encoder_out
    ]
    args = [x, encoder_out]
    if has_mask:
        # TODO(synk): 2-D additive float mask only (shared over batch & heads).
        in_specs.append(full2d((T, Tk)))
        args.append(attn_mask.astype(jnp.float32))

    # TODO(synk): single-buffer these constant-index weight blocks
    # (pipeline_mode=pl.Buffered(1)) / tile the FFN F dim at production C, F.
    in_specs += [
        full2d((kernel_size, C)),                          # conv taps
        full2d((1, C)), full2d((1, C)),                    # conv LN
        full2d((C, C)), full2d((1, C)),                    # Wq, bq
        full2d((C, 2 * C)), full2d((1, 2 * C)),            # Wk|Wv, bk|bv
        full2d((C, C)), full2d((1, C)),                    # Wo, bo
        full2d((1, C)), full2d((1, C)),                    # mha LN
        full2d((C, F)), full2d((1, F)),                    # W1, b1
        full2d((F, C)), full2d((1, C)),                    # W2, b2
        full2d((1, C)), full2d((1, C)),                    # mlp LN
    ]
    args += [
        wc, conv["gamma"], conv["beta"],
        bf(mha["wq"]), mha["bq"], wkv, bkv, bf(mha["wo"]), mha["bo"],
        mha["gamma"], mha["beta"],
        bf(mlp["w1"]), mlp["b1"], bf(mlp["w2"]), mlp["b2"],
        mlp["gamma"], mlp["beta"],
    ]

    kernel = _make_decoder_kernel(Bb=Bb, T=T, Tk=Tk, C=C, K=kernel_size,
                                  dil=dil, n_heads=n_heads, head_dim=head_dim,
                                  has_mask=has_mask)
    return pl.pallas_call(
        kernel,
        out_shape=jax.ShapeDtypeStruct((B, T, C), jnp.float32),
        grid=(B // Bb,),
        in_specs=in_specs,
        out_specs=pl.BlockSpec((Bb, T, C), lambda b: (b, 0, 0)),
        compiler_params=pltpu.CompilerParams(
            dimension_semantics=("parallel",),             # batch-block axis
            vmem_limit_bytes=32 * 1024 * 1024),            # ample; v7x-safe
    )(*args)


# ----------------------------------------------------------------------------
# Parameters + pure-JAX reference (f32) for a sanity check
# ----------------------------------------------------------------------------
def init_params(key, d_model, n_heads, dim_feedforward, kernel_size):
    ks = jax.random.split(key, 8)
    n = lambda k, s: (0.02 * jax.random.normal(k, s)).astype(jnp.float32)
    zeros = lambda s: jnp.zeros(s, jnp.float32)
    ones = lambda s: jnp.ones(s, jnp.float32)
    return {
        "conv": {"w": n(ks[0], (n_heads, kernel_size)),
                 "gamma": ones((1, d_model)), "beta": zeros((1, d_model))},
        "mha": {"wq": n(ks[1], (d_model, d_model)), "bq": zeros((1, d_model)),
                "wk": n(ks[2], (d_model, d_model)), "bk": zeros((1, d_model)),
                "wv": n(ks[3], (d_model, d_model)), "bv": zeros((1, d_model)),
                "wo": n(ks[4], (d_model, d_model)), "bo": zeros((1, d_model)),
                "gamma": ones((1, d_model)), "beta": zeros((1, d_model))},
        "mlp": {"w1": n(ks[5], (d_model, dim_feedforward)),
                "b1": zeros((1, dim_feedforward)),
                "w2": n(ks[6], (dim_feedforward, d_model)),
                "b2": zeros((1, d_model)),
                "gamma": ones((1, d_model)), "beta": zeros((1, d_model))},
    }


def _reference(x, encoder_out, params, *, n_heads, kernel_size, dilation=None,
               attn_mask=None):
    B, T, C = x.shape
    dil = 1 if dilation is None else dilation
    head_dim = C // n_heads

    def ln(y, g, b):
        mu = jnp.mean(y, -1, keepdims=True)
        var = jnp.mean((y - mu) ** 2, -1, keepdims=True)
        return (y - mu) * jax.lax.rsqrt(var + EPS) * g + b

    w_sm = jax.nn.softmax(params["conv"]["w"], axis=-1)
    wc = jnp.repeat(w_sm, C // n_heads, axis=0).T                 # (K, C)
    pad = (kernel_size - 1) * dil
    xp = jnp.pad(x, ((0, 0), (pad, 0), (0, 0)))
    acc = sum(wc[k][None, None, :] * xp[:, k * dil:k * dil + T, :]
              for k in range(kernel_size))
    y1 = ln(x + acc, params["conv"]["gamma"], params["conv"]["beta"])

    m = params["mha"]
    q = y1 @ m["wq"] + m["bq"]
    k = encoder_out @ m["wk"] + m["bk"]
    v = encoder_out @ m["wv"] + m["bv"]
    qh = q.reshape(B, T, n_heads, head_dim).transpose(0, 2, 1, 3)
    kh = k.reshape(B, -1, n_heads, head_dim).transpose(0, 2, 1, 3)
    vh = v.reshape(B, -1, n_heads, head_dim).transpose(0, 2, 1, 3)
    s = jnp.einsum("bhqd,bhkd->bhqk", qh, kh) / (head_dim ** 0.5)
    if attn_mask is not None:
        s = s + attn_mask
    p = jax.nn.softmax(s, axis=-1)
    ctx = jnp.einsum("bhqk,bhkd->bhqd", p, vh).transpose(0, 2, 1, 3)
    ctx = ctx.reshape(B, T, C)
    y2 = ln(y1 + ctx @ m["wo"] + m["bo"], m["gamma"], m["beta"])

    f = params["mlp"]
    h = jnp.maximum(y2 @ f["w1"] + f["b1"], 0.0)
    return ln(y2 + h @ f["w2"] + f["b2"], f["gamma"], f["beta"])


if __name__ == "__main__":
    B, Tq, Tk = 4, 8, 16
    d_model, n_heads, dim_ff, kernel_size = 32, 4, 64, 3

    key = jax.random.PRNGKey(0)
    kx, kenc, kp = jax.random.split(key, 3)
    x = jax.random.normal(kx, (B, Tq, d_model), jnp.float32)
    encoder_out = jax.random.normal(kenc, (B, Tk, d_model), jnp.float32)
    params = init_params(kp, d_model, n_heads, dim_ff, kernel_size)

    # 2-D additive float attention mask (shared over batch & heads).
    rows = jnp.arange(Tq)[:, None]
    cols = jnp.arange(Tk)[None, :]
    attn_mask = jnp.where(cols <= rows + 8, 0.0, -1e9).astype(jnp.float32)

    ok = True
    for mask in (None, attn_mask):
        out = light_conv_decoder_layer(x, encoder_out, params, n_heads=n_heads,
                                       kernel_size=kernel_size, dilation=None,
                                       attn_mask=mask)
        out = jax.block_until_ready(out)
        ref = _reference(x, encoder_out, params, n_heads=n_heads,
                         kernel_size=kernel_size, dilation=None,
                         attn_mask=mask)
        assert out.shape == (B, Tq, d_model)
        assert bool(jnp.all(jnp.isfinite(out)))
        # bf16 MXU + approx reciprocal -> loose tolerance vs. f32 reference.
        ok &= bool(jnp.allclose(out, ref, atol=5e-2, rtol=5e-2))
        assert ok, float(jnp.max(jnp.abs(out - ref)))

    print("KERNEL_OK")
</pallas_src>

<mosaic_0001>
module attributes {stable_mosaic.version = 11 : i64} {
  func.func @kernel(%arg0: i32, %arg1: memref<2x8x32xf32, #tpu.memory_space<vmem>>, %arg2: memref<2x16x32xf32, #tpu.memory_space<vmem>>, %arg3: memref<3x32xf32, #tpu.memory_space<vmem>>, %arg4: memref<1x32xf32, #tpu.memory_space<vmem>>, %arg5: memref<1x32xf32, #tpu.memory_space<vmem>>, %arg6: memref<32x32xbf16, #tpu.memory_space<vmem>>, %arg7: memref<1x32xf32, #tpu.memory_space<vmem>>, %arg8: memref<32x64xbf16, #tpu.memory_space<vmem>>, %arg9: memref<1x64xf32, #tpu.memory_space<vmem>>, %arg10: memref<32x32xbf16, #tpu.memory_space<vmem>>, %arg11: memref<1x32xf32, #tpu.memory_space<vmem>>, %arg12: memref<1x32xf32, #tpu.memory_space<vmem>>, %arg13: memref<1x32xf32, #tpu.memory_space<vmem>>, %arg14: memref<32x64xbf16, #tpu.memory_space<vmem>>, %arg15: memref<1x64xf32, #tpu.memory_space<vmem>>, %arg16: memref<64x32xbf16, #tpu.memory_space<vmem>>, %arg17: memref<1x32xf32, #tpu.memory_space<vmem>>, %arg18: memref<1x32xf32, #tpu.memory_space<vmem>>, %arg19: memref<1x32xf32, #tpu.memory_space<vmem>>, %arg20: memref<2x8x32xf32, #tpu.memory_space<vmem>>) attributes {dimension_semantics = [#tpu.dimension_semantics<parallel>], iteration_bounds = array<i64: 2>, scalar_prefetch = 0 : i64, scratch_operands = 0 : i64, tpu.core_type = #tpu.core_type<tc>, window_params = [{transform_indices = @transform_0, window_bounds = array<i64: 2, 8, 32>}, {transform_indices = @transform_1, window_bounds = array<i64: 2, 16, 32>}, {pipeline_mode = #tpu.pipeline_mode<synchronous>, transform_indices = @transform_2, window_bounds = array<i64: 3, 32>}, {pipeline_mode = #tpu.pipeline_mode<synchronous>, transform_indices = @transform_3, window_bounds = array<i64: 1, 32>}, {pipeline_mode = #tpu.pipeline_mode<synchronous>, transform_indices = @transform_4, window_bounds = array<i64: 1, 32>}, {pipeline_mode = #tpu.pipeline_mode<synchronous>, transform_indices = @transform_5, window_bounds = array<i64: 32, 32>}, {pipeline_mode = #tpu.pipeline_mode<synchronous>, transform_indices = @transform_6, window_bounds = array<i64: 1, 32>}, {pipeline_mode = #tpu.pipeline_mode<synchronous>, transform_indices = @transform_7, window_bounds = array<i64: 32, 64>}, {pipeline_mode = #tpu.pipeline_mode<synchronous>, transform_indices = @transform_8, window_bounds = array<i64: 1, 64>}, {pipeline_mode = #tpu.pipeline_mode<synchronous>, transform_indices = @transform_9, window_bounds = array<i64: 32, 32>}, {pipeline_mode = #tpu.pipeline_mode<synchronous>, transform_indices = @transform_10, window_bounds = array<i64: 1, 32>}, {pipeline_mode = #tpu.pipeline_mode<synchronous>, transform_indices = @transform_11, window_bounds = array<i64: 1, 32>}, {pipeline_mode = #tpu.pipeline_mode<synchronous>, transform_indices = @transform_12, window_bounds = array<i64: 1, 32>}, {pipeline_mode = #tpu.pipeline_mode<synchronous>, transform_indices = @transform_13, window_bounds = array<i64: 32, 64>}, {pipeline_mode = #tpu.pipeline_mode<synchronous>, transform_indices = @transform_14, window_bounds = array<i64: 1, 64>}, {pipeline_mode = #tpu.pipeline_mode<synchronous>, transform_indices = @transform_15, window_bounds = array<i64: 64, 32>}, {pipeline_mode = #tpu.pipeline_mode<synchronous>, transform_indices = @transform_16, window_bounds = array<i64: 1, 32>}, {pipeline_mode = #tpu.pipeline_mode<synchronous>, transform_indices = @transform_17, window_bounds = array<i64: 1, 32>}, {pipeline_mode = #tpu.pipeline_mode<synchronous>, transform_indices = @transform_18, window_bounds = array<i64: 1, 32>}, {transform_indices = @transform_19, window_bounds = array<i64: 2, 8, 32>}]} {
    %c0 = arith.constant 0 : index
    %c0_0 = arith.constant 0 : index
    %c0_1 = arith.constant 0 : index
    %0 = vector.load %arg1[%c0, %c0_0, %c0_1] : memref<2x8x32xf32, #tpu.memory_space<vmem>>, vector<2x8x32xf32>
    %1 = vector.shape_cast %0 : vector<2x8x32xf32> to vector<16x32xf32>
    %c0_2 = arith.constant 0 : index
    %c0_3 = arith.constant 0 : index
    %2 = vector.load %arg3[%c0_2, %c0_3] : memref<3x32xf32, #tpu.memory_space<vmem>>, vector<3x32xf32>
    %3 = tpu.iota {dimensions = array<i32: 1>} : vector<2x8x32xi32>
    %4 = vector.shape_cast %3 : vector<2x8x32xi32> to vector<16x32xi32>
    %cst = arith.constant 0.000000e+00 : f32
    %5 = vector.broadcast %cst : f32 to vector<16x32xf32>
    %c2_i32 = arith.constant 2 : i32
    %6 = tpu.dynamic_rotate %1 by %c2_i32 dim 0 : vector<16x32xf32>, i32 -> vector<16x32xf32>
    %c2_i32_4 = arith.constant 2 : i32
    %7 = vector.broadcast %c2_i32_4 : i32 to vector<16x32xi32>
    %8 = arith.cmpi sge, %4, %7 : vector<16x32xi32>
    %cst_5 = arith.constant 0.000000e+00 : f32
    %9 = vector.broadcast %cst_5 : f32 to vector<16x32xf32>
    %10 = arith.select %8, %6, %9 : vector<16x32xi1>, vector<16x32xf32>
    %11 = vector.extract_strided_slice %2 {offsets = [0, 0], sizes = [1, 32], strides = [1, 1]} : vector<3x32xf32> to vector<1x32xf32>
    %12 = vector.broadcast %11 : vector<1x32xf32> to vector<16x32xf32>
    %13 = arith.mulf %12, %10 : vector<16x32xf32>
    %14 = arith.addf %5, %13 : vector<16x32xf32>
    %c1_i32 = arith.constant 1 : i32
    %15 = tpu.dynamic_rotate %1 by %c1_i32 dim 0 : vector<16x32xf32>, i32 -> vector<16x32xf32>
    %c1_i32_6 = arith.constant 1 : i32
    %16 = vector.broadcast %c1_i32_6 : i32 to vector<16x32xi32>
    %17 = arith.cmpi sge, %4, %16 : vector<16x32xi32>
    %cst_7 = arith.constant 0.000000e+00 : f32
    %18 = vector.broadcast %cst_7 : f32 to vector<16x32xf32>
    %19 = arith.select %17, %15, %18 : vector<16x32xi1>, vector<16x32xf32>
    %20 = vector.extract_strided_slice %2 {offsets = [1, 0], sizes = [1, 32], strides = [1, 1]} : vector<3x32xf32> to vector<1x32xf32>
    %21 = vector.broadcast %20 : vector<1x32xf32> to vector<16x32xf32>
    %22 = arith.mulf %21, %19 : vector<16x32xf32>
    %23 = arith.addf %14, %22 : vector<16x32xf32>
    %24 = vector.extract_strided_slice %2 {offsets = [2, 0], sizes = [1, 32], strides = [1, 1]} : vector<3x32xf32> to vector<1x32xf32>
    %25 = vector.broadcast %24 : vector<1x32xf32> to vector<16x32xf32>
    %26 = arith.mulf %25, %1 : vector<16x32xf32>
    %27 = arith.addf %23, %26 : vector<16x32xf32>
    %28 = arith.addf %1, %27 : vector<16x32xf32>
    %cst_8 = arith.constant dense<0.000000e+00> : vector<16xf32>
    %29 = vector.multi_reduction <add>, %28, %cst_8 [1] : vector<16x32xf32> to vector<16xf32>
    %30 = vector.shape_cast %29 : vector<16xf32> to vector<16x1xf32>
    %cst_9 = arith.constant 3.200000e+01 : f32
    %31 = vector.broadcast %cst_9 : f32 to vector<16x1xf32>
    %32 = arith.divf %30, %31 : vector<16x1xf32>
    %33 = vector.broadcast %32 : vector<16x1xf32> to vector<16x32xf32>
    %34 = arith.subf %28, %33 : vector<16x32xf32>
    %35 = arith.mulf %34, %34 : vector<16x32xf32>
    %cst_10 = arith.constant dense<0.000000e+00> : vector<16xf32>
    %36 = vector.multi_reduction <add>, %35, %cst_10 [1] : vector<16x32xf32> to vector<16xf32>
    %37 = vector.shape_cast %36 : vector<16xf32> to vector<16x1xf32>
    %cst_11 = arith.constant 3.200000e+01 : f32
    %38 = vector.broadcast %cst_11 : f32 to vector<16x1xf32>
    %39 = arith.divf %37, %38 : vector<16x1xf32>
    %40 = vector.broadcast %32 : vector<16x1xf32> to vector<16x32xf32>
    %41 = arith.subf %28, %40 : vector<16x32xf32>
    %cst_12 = arith.constant 9.99999974E-6 : f32
    %42 = vector.broadcast %cst_12 : f32 to vector<16x1xf32>
    %43 = arith.addf %39, %42 : vector<16x1xf32>
    %44 = math.rsqrt %43 : vector<16x1xf32>
    %45 = vector.broadcast %44 : vector<16x1xf32> to vector<16x32xf32>
    %46 = arith.mulf %41, %45 : vector<16x32xf32>
    %c0_13 = arith.constant 0 : index
    %c0_14 = arith.constant 0 : index
    %47 = vector.load %arg4[%c0_13, %c0_14] : memref<1x32xf32, #tpu.memory_space<vmem>>, vector<1x32xf32>
    %48 = vector.broadcast %47 : vector<1x32xf32> to vector<16x32xf32>
    %49 = arith.mulf %46, %48 : vector<16x32xf32>
    %c0_15 = arith.constant 0 : index
    %c0_16 = arith.constant 0 : index
    %50 = vector.load %arg5[%c0_15, %c0_16] : memref<1x32xf32, #tpu.memory_space<vmem>>, vector<1x32xf32>
    %51 = vector.broadcast %50 : vector<1x32xf32> to vector<16x32xf32>
    %52 = arith.addf %49, %51 : vector<16x32xf32>
    %53 = arith.truncf %52 : vector<16x32xf32> to vector<16x32xbf16>
    %c0_17 = arith.constant 0 : index
    %c0_18 = arith.constant 0 : index
    %c0_19 = arith.constant 0 : index
    %54 = vector.load %arg2[%c0_17, %c0_18, %c0_19] : memref<2x16x32xf32, #tpu.memory_space<vmem>>, vector<2x16x32xf32>
    %55 = arith.truncf %54 : vector<2x16x32xf32> to vector<2x16x32xbf16>
    %56 = vector.shape_cast %55 : vector<2x16x32xbf16> to vector<32x32xbf16>
    %c0_20 = arith.constant 0 : index
    %c0_21 = arith.constant 0 : index
    %57 = vector.load %arg6[%c0_20, %c0_21] : memref<32x32xbf16, #tpu.memory_space<vmem>>, vector<32x32xbf16>
    %cst_22 = arith.constant dense<0.000000e+00> : vector<16x32xf32>
    %58 = tpu.matmul %53, %57, %cst_22 {dimension_numbers = #tpu.dot_dimension_numbers<[1], [0], [0], [1], [0, 0, 1, 1], [], []>} : vector<16x32xbf16>, vector<32x32xbf16>, vector<16x32xf32> -> vector<16x32xf32>
    %c0_23 = arith.constant 0 : index
    %c0_24 = arith.constant 0 : index
    %59 = vector.load %arg7[%c0_23, %c0_24] : memref<1x32xf32, #tpu.memory_space<vmem>>, vector<1x32xf32>
    %60 = vector.broadcast %59 : vector<1x32xf32> to vector<16x32xf32>
    %61 = arith.addf %58, %60 : vector<16x32xf32>
    %c0_25 = arith.constant 0 : index
    %c0_26 = arith.constant 0 : index
    %62 = vector.load %arg8[%c0_25, %c0_26] : memref<32x64xbf16, #tpu.memory_space<vmem>>, vector<32x64xbf16>
    %cst_27 = arith.constant dense<0.000000e+00> : vector<32x64xf32>
    %63 = tpu.matmul %56, %62, %cst_27 {dimension_numbers = #tpu.dot_dimension_numbers<[1], [0], [0], [1], [0, 0, 1, 1], [], []>} : vector<32x32xbf16>, vector<32x64xbf16>, vector<32x64xf32> -> vector<32x64xf32>
    %c0_28 = arith.constant 0 : index
    %c0_29 = arith.constant 0 : index
    %64 = vector.load %arg9[%c0_28, %c0_29] : memref<1x64xf32, #tpu.memory_space<vmem>>, vector<1x64xf32>
    %65 = vector.broadcast %64 : vector<1x64xf32> to vector<32x64xf32>
    %66 = arith.addf %63, %65 : vector<32x64xf32>
    %cst_30 = arith.constant 0.353553385 : f32
    %67 = vector.broadcast %cst_30 : f32 to vector<16x32xf32>
    %68 = arith.mulf %61, %67 : vector<16x32xf32>
    %69 = arith.truncf %68 : vector<16x32xf32> to vector<16x32xbf16>
    %70 = vector.shape_cast %69 : vector<16x32xbf16> to vector<2x8x32xbf16>
    %71 = vector.extract_strided_slice %66 {offsets = [0, 0], sizes = [32, 32], strides = [1, 1]} : vector<32x64xf32> to vector<32x32xf32>
    %72 = arith.truncf %71 : vector<32x32xf32> to vector<32x32xbf16>
    %73 = vector.shape_cast %72 : vector<32x32xbf16> to vector<2x16x32xbf16>
    %74 = vector.extract_strided_slice %66 {offsets = [0, 32], sizes = [32, 32], strides = [1, 1]} : vector<32x64xf32> to vector<32x32xf32>
    %75 = arith.truncf %74 : vector<32x32xf32> to vector<32x32xbf16>
    %76 = vector.shape_cast %75 : vector<32x32xbf16> to vector<2x16x32xbf16>
    %77 = vector.extract_strided_slice %70 {offsets = [0, 0, 0], sizes = [2, 8, 8], strides = [1, 1, 1]} : vector<2x8x32xbf16> to vector<2x8x8xbf16>
    %78 = vector.extract_strided_slice %73 {offsets = [0, 0, 0], sizes = [2, 16, 8], strides = [1, 1, 1]} : vector<2x16x32xbf16> to vector<2x16x8xbf16>
    %79 = vector.extract_strided_slice %76 {offsets = [0, 0, 0], sizes = [2, 16, 8], strides = [1, 1, 1]} : vector<2x16x32xbf16> to vector<2x16x8xbf16>
    "tpu.trace_start"() <{level = 10 : i32, message = "bqd,bkd->bqk"}> : () -> ()
    %cst_31 = arith.constant dense<0.000000e+00> : vector<2x8x16xf32>
    %80 = tpu.matmul %77, %78, %cst_31 {dimension_numbers = #tpu.dot_dimension_numbers<[2], [2], [1], [1], [0, 0, 0, 1, 1, 1], [0], [0]>} : vector<2x8x8xbf16>, vector<2x16x8xbf16>, vector<2x8x16xf32> -> vector<2x8x16xf32>
    "tpu.trace_stop"() : () -> ()
    %cst_32 = arith.constant dense<0xFF800000> : vector<2x8xf32>
    %81 = vector.multi_reduction <maximumf>, %80, %cst_32 [2] : vector<2x8x16xf32> to vector<2x8xf32>
    %82 = vector.shape_cast %81 : vector<2x8xf32> to vector<2x8x1xf32>
    %83 = vector.broadcast %82 : vector<2x8x1xf32> to vector<2x8x16xf32>
    %84 = arith.subf %80, %83 : vector<2x8x16xf32>
    %85 = math.exp %84 : vector<2x8x16xf32>
    %cst_33 = arith.constant dense<0.000000e+00> : vector<2x8xf32>
    %86 = vector.multi_reduction <add>, %85, %cst_33 [2] : vector<2x8x16xf32> to vector<2x8xf32>
    %87 = vector.shape_cast %86 : vector<2x8xf32> to vector<2x8x1xf32>
    %88 = tpu.reciprocal %87 {approx = true} : vector<2x8x1xf32> -> vector<2x8x1xf32>
    %89 = vector.broadcast %88 : vector<2x8x1xf32> to vector<2x8x16xf32>
    %90 = arith.mulf %85, %89 : vector<2x8x16xf32>
    %91 = arith.truncf %90 : vector<2x8x16xf32> to vector<2x8x16xbf16>
    "tpu.trace_start"() <{level = 10 : i32, message = "bqk,bkd->bqd"}> : () -> ()
    %cst_34 = arith.constant dense<0.000000e+00> : vector<2x8x8xf32>
    %92 = tpu.matmul %91, %79, %cst_34 {dimension_numbers = #tpu.dot_dimension_numbers<[2], [1], [1], [2], [0, 0, 0, 1, 1, 2], [0], [0]>} : vector<2x8x16xbf16>, vector<2x16x8xbf16>, vector<2x8x8xf32> -> vector<2x8x8xf32>
    "tpu.trace_stop"() : () -> ()
    %93 = vector.extract_strided_slice %70 {offsets = [0, 0, 8], sizes = [2, 8, 8], strides = [1, 1, 1]} : vector<2x8x32xbf16> to vector<2x8x8xbf16>
    %94 = vector.extract_strided_slice %73 {offsets = [0, 0, 8], sizes = [2, 16, 8], strides = [1, 1, 1]} : vector<2x16x32xbf16> to vector<2x16x8xbf16>
    %95 = vector.extract_strided_slice %76 {offsets = [0, 0, 8], sizes = [2, 16, 8], strides = [1, 1, 1]} : vector<2x16x32xbf16> to vector<2x16x8xbf16>
    "tpu.trace_start"() <{level = 10 : i32, message = "bqd,bkd->bqk"}> : () -> ()
    %cst_35 = arith.constant dense<0.000000e+00> : vector<2x8x16xf32>
    %96 = tpu.matmul %93, %94, %cst_35 {dimension_numbers = #tpu.dot_dimension_numbers<[2], [2], [1], [1], [0, 0, 0, 1, 1, 1], [0], [0]>} : vector<2x8x8xbf16>, vector<2x16x8xbf16>, vector<2x8x16xf32> -> vector<2x8x16xf32>
    "tpu.trace_stop"() : () -> ()
    %cst_36 = arith.constant dense<0xFF800000> : vector<2x8xf32>
    %97 = vector.multi_reduction <maximumf>, %96, %cst_36 [2] : vector<2x8x16xf32> to vector<2x8xf32>
    %98 = vector.shape_cast %97 : vector<2x8xf32> to vector<2x8x1xf32>
    %99 = vector.broadcast %98 : vector<2x8x1xf32> to vector<2x8x16xf32>
    %100 = arith.subf %96, %99 : vector<2x8x16xf32>
    %101 = math.exp %100 : vector<2x8x16xf32>
    %cst_37 = arith.constant dense<0.000000e+00> : vector<2x8xf32>
    %102 = vector.multi_reduction <add>, %101, %cst_37 [2] : vector<2x8x16xf32> to vector<2x8xf32>
    %103 = vector.shape_cast %102 : vector<2x8xf32> to vector<2x8x1xf32>
    %104 = tpu.reciprocal %103 {approx = true} : vector<2x8x1xf32> -> vector<2x8x1xf32>
    %105 = vector.broadcast %104 : vector<2x8x1xf32> to vector<2x8x16xf32>
    %106 = arith.mulf %101, %105 : vector<2x8x16xf32>
    %107 = arith.truncf %106 : vector<2x8x16xf32> to vector<2x8x16xbf16>
    "tpu.trace_start"() <{level = 10 : i32, message = "bqk,bkd->bqd"}> : () -> ()
    %cst_38 = arith.constant dense<0.000000e+00> : vector<2x8x8xf32>
    %108 = tpu.matmul %107, %95, %cst_38 {dimension_numbers = #tpu.dot_dimension_numbers<[2], [1], [1], [2], [0, 0, 0, 1, 1, 2], [0], [0]>} : vector<2x8x16xbf16>, vector<2x16x8xbf16>, vector<2x8x8xf32> -> vector<2x8x8xf32>
    "tpu.trace_stop"() : () -> ()
    %109 = vector.extract_strided_slice %70 {offsets = [0, 0, 16], sizes = [2, 8, 8], strides = [1, 1, 1]} : vector<2x8x32xbf16> to vector<2x8x8xbf16>
    %110 = vector.extract_strided_slice %73 {offsets = [0, 0, 16], sizes = [2, 16, 8], strides = [1, 1, 1]} : vector<2x16x32xbf16> to vector<2x16x8xbf16>
    %111 = vector.extract_strided_slice %76 {offsets = [0, 0, 16], sizes = [2, 16, 8], strides = [1, 1, 1]} : vector<2x16x32xbf16> to vector<2x16x8xbf16>
    "tpu.trace_start"() <{level = 10 : i32, message = "bqd,bkd->bqk"}> : () -> ()
    %cst_39 = arith.constant dense<0.000000e+00> : vector<2x8x16xf32>
    %112 = tpu.matmul %109, %110, %cst_39 {dimension_numbers = #tpu.dot_dimension_numbers<[2], [2], [1], [1], [0, 0, 0, 1, 1, 1], [0], [0]>} : vector<2x8x8xbf16>, vector<2x16x8xbf16>, vector<2x8x16xf32> -> vector<2x8x16xf32>
    "tpu.trace_stop"() : () -> ()
    %cst_40 = arith.constant dense<0xFF800000> : vector<2x8xf32>
    %113 = vector.multi_reduction <maximumf>, %112, %cst_40 [2] : vector<2x8x16xf32> to vector<2x8xf32>
    %114 = vector.shape_cast %113 : vector<2x8xf32> to vector<2x8x1xf32>
    %115 = vector.broadcast %114 : vector<2x8x1xf32> to vector<2x8x16xf32>
    %116 = arith.subf %112, %115 : vector<2x8x16xf32>
    %117 = math.exp %116 : vector<2x8x16xf32>
    %cst_41 = arith.constant dense<0.000000e+00> : vector<2x8xf32>
    %118 = vector.multi_reduction <add>, %117, %cst_41 [2] : vector<2x8x16xf32> to vector<2x8xf32>
    %119 = vector.shape_cast %118 : vector<2x8xf32> to vector<2x8x1xf32>
    %120 = tpu.reciprocal %119 {approx = true} : vector<2x8x1xf32> -> vector<2x8x1xf32>
    %121 = vector.broadcast %120 : vector<2x8x1xf32> to vector<2x8x16xf32>
    %122 = arith.mulf %117, %121 : vector<2x8x16xf32>
    %123 = arith.truncf %122 : vector<2x8x16xf32> to vector<2x8x16xbf16>
    "tpu.trace_start"() <{level = 10 : i32, message = "bqk,bkd->bqd"}> : () -> ()
    %cst_42 = arith.constant dense<0.000000e+00> : vector<2x8x8xf32>
    %124 = tpu.matmul %123, %111, %cst_42 {dimension_numbers = #tpu.dot_dimension_numbers<[2], [1], [1], [2], [0, 0, 0, 1, 1, 2], [0], [0]>} : vector<2x8x16xbf16>, vector<2x16x8xbf16>, vector<2x8x8xf32> -> vector<2x8x8xf32>
    "tpu.trace_stop"() : () -> ()
    %125 = vector.extract_strided_slice %70 {offsets = [0, 0, 24], sizes = [2, 8, 8], strides = [1, 1, 1]} : vector<2x8x32xbf16> to vector<2x8x8xbf16>
    %126 = vector.extract_strided_slice %73 {offsets = [0, 0, 24], sizes = [2, 16, 8], strides = [1, 1, 1]} : vector<2x16x32xbf16> to vector<2x16x8xbf16>
    %127 = vector.extract_strided_slice %76 {offsets = [0, 0, 24], sizes = [2, 16, 8], strides = [1, 1, 1]} : vector<2x16x32xbf16> to vector<2x16x8xbf16>
    "tpu.trace_start"() <{level = 10 : i32, message = "bqd,bkd->bqk"}> : () -> ()
    %cst_43 = arith.constant dense<0.000000e+00> : vector<2x8x16xf32>
    %128 = tpu.matmul %125, %126, %cst_43 {dimension_numbers = #tpu.dot_dimension_numbers<[2], [2], [1], [1], [0, 0, 0, 1, 1, 1], [0], [0]>} : vector<2x8x8xbf16>, vector<2x16x8xbf16>, vector<2x8x16xf32> -> vector<2x8x16xf32>
    "tpu.trace_stop"() : () -> ()
    %cst_44 = arith.constant dense<0xFF800000> : vector<2x8xf32>
    %129 = vector.multi_reduction <maximumf>, %128, %cst_44 [2] : vector<2x8x16xf32> to vector<2x8xf32>
    %130 = vector.shape_cast %129 : vector<2x8xf32> to vector<2x8x1xf32>
    %131 = vector.broadcast %130 : vector<2x8x1xf32> to vector<2x8x16xf32>
    %132 = arith.subf %128, %131 : vector<2x8x16xf32>
    %133 = math.exp %132 : vector<2x8x16xf32>
    %cst_45 = arith.constant dense<0.000000e+00> : vector<2x8xf32>
    %134 = vector.multi_reduction <add>, %133, %cst_45 [2] : vector<2x8x16xf32> to vector<2x8xf32>
    %135 = vector.shape_cast %134 : vector<2x8xf32> to vector<2x8x1xf32>
    %136 = tpu.reciprocal %135 {approx = true} : vector<2x8x1xf32> -> vector<2x8x1xf32>
    %137 = vector.broadcast %136 : vector<2x8x1xf32> to vector<2x8x16xf32>
    %138 = arith.mulf %133, %137 : vector<2x8x16xf32>
    %139 = arith.truncf %138 : vector<2x8x16xf32> to vector<2x8x16xbf16>
    "tpu.trace_start"() <{level = 10 : i32, message = "bqk,bkd->bqd"}> : () -> ()
    %cst_46 = arith.constant dense<0.000000e+00> : vector<2x8x8xf32>
    %140 = tpu.matmul %139, %127, %cst_46 {dimension_numbers = #tpu.dot_dimension_numbers<[2], [1], [1], [2], [0, 0, 0, 1, 1, 2], [0], [0]>} : vector<2x8x16xbf16>, vector<2x16x8xbf16>, vector<2x8x8xf32> -> vector<2x8x8xf32>
    "tpu.trace_stop"() : () -> ()
    %141 = tpu.concatenate %92, %108, %124, %140 in 2 : vector<2x8x8xf32>, vector<2x8x8xf32>, vector<2x8x8xf32>, vector<2x8x8xf32> -> vector<2x8x32xf32>
    %142 = vector.shape_cast %141 : vector<2x8x32xf32> to vector<16x32xf32>
    %143 = arith.truncf %142 : vector<16x32xf32> to vector<16x32xbf16>
    %c0_47 = arith.constant 0 : index
    %c0_48 = arith.constant 0 : index
    %144 = vector.load %arg10[%c0_47, %c0_48] : memref<32x32xbf16, #tpu.memory_space<vmem>>, vector<32x32xbf16>
    %cst_49 = arith.constant dense<0.000000e+00> : vector<16x32xf32>
    %145 = tpu.matmul %143, %144, %cst_49 {dimension_numbers = #tpu.dot_dimension_numbers<[1], [0], [0], [1], [0, 0, 1, 1], [], []>} : vector<16x32xbf16>, vector<32x32xbf16>, vector<16x32xf32> -> vector<16x32xf32>
    %c0_50 = arith.constant 0 : index
    %c0_51 = arith.constant 0 : index
    %146 = vector.load %arg11[%c0_50, %c0_51] : memref<1x32xf32, #tpu.memory_space<vmem>>, vector<1x32xf32>
    %147 = vector.broadcast %146 : vector<1x32xf32> to vector<16x32xf32>
    %148 = arith.addf %145, %147 : vector<16x32xf32>
    %149 = arith.addf %52, %148 : vector<16x32xf32>
    %cst_52 = arith.constant dense<0.000000e+00> : vector<16xf32>
    %150 = vector.multi_reduction <add>, %149, %cst_52 [1] : vector<16x32xf32> to vector<16xf32>
    %151 = vector.shape_cast %150 : vector<16xf32> to vector<16x1xf32>
    %cst_53 = arith.constant 3.200000e+01 : f32
    %152 = vector.broadcast %cst_53 : f32 to vector<16x1xf32>
    %153 = arith.divf %151, %152 : vector<16x1xf32>
    %154 = vector.broadcast %153 : vector<16x1xf32> to vector<16x32xf32>
    %155 = arith.subf %149, %154 : vector<16x32xf32>
    %156 = arith.mulf %155, %155 : vector<16x32xf32>
    %cst_54 = arith.constant dense<0.000000e+00> : vector<16xf32>
    %157 = vector.multi_reduction <add>, %156, %cst_54 [1] : vector<16x32xf32> to vector<16xf32>
    %158 = vector.shape_cast %157 : vector<16xf32> to vector<16x1xf32>
    %cst_55 = arith.constant 3.200000e+01 : f32
    %159 = vector.broadcast %cst_55 : f32 to vector<16x1xf32>
    %160 = arith.divf %158, %159 : vector<16x1xf32>
    %161 = vector.broadcast %153 : vector<16x1xf32> to vector<16x32xf32>
    %162 = arith.subf %149, %161 : vector<16x32xf32>
    %cst_56 = arith.constant 9.99999974E-6 : f32
    %163 = vector.broadcast %cst_56 : f32 to vector<16x1xf32>
    %164 = arith.addf %160, %163 : vector<16x1xf32>
    %165 = math.rsqrt %164 : vector<16x1xf32>
    %166 = vector.broadcast %165 : vector<16x1xf32> to vector<16x32xf32>
    %167 = arith.mulf %162, %166 : vector<16x32xf32>
    %c0_57 = arith.constant 0 : index
    %c0_58 = arith.constant 0 : index
    %168 = vector.load %arg12[%c0_57, %c0_58] : memref<1x32xf32, #tpu.memory_space<vmem>>, vector<1x32xf32>
    %169 = vector.broadcast %168 : vector<1x32xf32> to vector<16x32xf32>
    %170 = arith.mulf %167, %169 : vector<16x32xf32>
    %c0_59 = arith.constant 0 : index
    %c0_60 = arith.constant 0 : index
    %171 = vector.load %arg13[%c0_59, %c0_60] : memref<1x32xf32, #tpu.memory_space<vmem>>, vector<1x32xf32>
    %172 = vector.broadcast %171 : vector<1x32xf32> to vector<16x32xf32>
    %173 = arith.addf %170, %172 : vector<16x32xf32>
    %174 = arith.truncf %173 : vector<16x32xf32> to vector<16x32xbf16>
    %c0_61 = arith.constant 0 : index
    %c0_62 = arith.constant 0 : index
    %175 = vector.load %arg14[%c0_61, %c0_62] : memref<32x64xbf16, #tpu.memory_space<vmem>>, vector<32x64xbf16>
    %cst_63 = arith.constant dense<0.000000e+00> : vector<16x64xf32>
    %176 = tpu.matmul %174, %175, %cst_63 {dimension_numbers = #tpu.dot_dimension_numbers<[1], [0], [0], [1], [0, 0, 1, 1], [], []>} : vector<16x32xbf16>, vector<32x64xbf16>, vector<16x64xf32> -> vector<16x64xf32>
    %c0_64 = arith.constant 0 : index
    %c0_65 = arith.constant 0 : index
    %177 = vector.load %arg15[%c0_64, %c0_65] : memref<1x64xf32, #tpu.memory_space<vmem>>, vector<1x64xf32>
    %178 = vector.broadcast %177 : vector<1x64xf32> to vector<16x64xf32>
    %179 = arith.addf %176, %178 : vector<16x64xf32>
    %cst_66 = arith.constant 0.000000e+00 : f32
    %180 = vector.broadcast %cst_66 : f32 to vector<16x64xf32>
    %181 = arith.maximumf %179, %180 : vector<16x64xf32>
    %182 = arith.truncf %181 : vector<16x64xf32> to vector<16x64xbf16>
    %c0_67 = arith.constant 0 : index
    %c0_68 = arith.constant 0 : index
    %183 = vector.load %arg16[%c0_67, %c0_68] : memref<64x32xbf16, #tpu.memory_space<vmem>>, vector<64x32xbf16>
    %cst_69 = arith.constant dense<0.000000e+00> : vector<16x32xf32>
    %184 = tpu.matmul %182, %183, %cst_69 {dimension_numbers = #tpu.dot_dimension_numbers<[1], [0], [0], [1], [0, 0, 1, 1], [], []>} : vector<16x64xbf16>, vector<64x32xbf16>, vector<16x32xf32> -> vector<16x32xf32>
    %c0_70 = arith.constant 0 : index
    %c0_71 = arith.constant 0 : index
    %185 = vector.load %arg17[%c0_70, %c0_71] : memref<1x32xf32, #tpu.memory_space<vmem>>, vector<1x32xf32>
    %186 = vector.broadcast %185 : vector<1x32xf32> to vector<16x32xf32>
    %187 = arith.addf %184, %186 : vector<16x32xf32>
    %188 = arith.addf %173, %187 : vector<16x32xf32>
    %cst_72 = arith.constant dense<0.000000e+00> : vector<16xf32>
    %189 = vector.multi_reduction <add>, %188, %cst_72 [1] : vector<16x32xf32> to vector<16xf32>
    %190 = vector.shape_cast %189 : vector<16xf32> to vector<16x1xf32>
    %cst_73 = arith.constant 3.200000e+01 : f32
    %191 = vector.broadcast %cst_73 : f32 to vector<16x1xf32>
    %192 = arith.divf %190, %191 : vector<16x1xf32>
    %193 = vector.broadcast %192 : vector<16x1xf32> to vector<16x32xf32>
    %194 = arith.subf %188, %193 : vector<16x32xf32>
    %195 = arith.mulf %194, %194 : vector<16x32xf32>
    %cst_74 = arith.constant dense<0.000000e+00> : vector<16xf32>
    %196 = vector.multi_reduction <add>, %195, %cst_74 [1] : vector<16x32xf32> to vector<16xf32>
    %197 = vector.shape_cast %196 : vector<16xf32> to vector<16x1xf32>
    %cst_75 = arith.constant 3.200000e+01 : f32
    %198 = vector.broadcast %cst_75 : f32 to vector<16x1xf32>
    %199 = arith.divf %197, %198 : vector<16x1xf32>
    %200 = vector.broadcast %192 : vector<16x1xf32> to vector<16x32xf32>
    %201 = arith.subf %188, %200 : vector<16x32xf32>
    %cst_76 = arith.constant 9.99999974E-6 : f32
    %202 = vector.broadcast %cst_76 : f32 to vector<16x1xf32>
    %203 = arith.addf %199, %202 : vector<16x1xf32>
    %204 = math.rsqrt %203 : vector<16x1xf32>
    %205 = vector.broadcast %204 : vector<16x1xf32> to vector<16x32xf32>
    %206 = arith.mulf %201, %205 : vector<16x32xf32>
    %c0_77 = arith.constant 0 : index
    %c0_78 = arith.constant 0 : index
    %207 = vector.load %arg18[%c0_77, %c0_78] : memref<1x32xf32, #tpu.memory_space<vmem>>, vector<1x32xf32>
    %208 = vector.broadcast %207 : vector<1x32xf32> to vector<16x32xf32>
    %209 = arith.mulf %206, %208 : vector<16x32xf32>
    %c0_79 = arith.constant 0 : index
    %c0_80 = arith.constant 0 : index
    %210 = vector.load %arg19[%c0_79, %c0_80] : memref<1x32xf32, #tpu.memory_space<vmem>>, vector<1x32xf32>
    %211 = vector.broadcast %210 : vector<1x32xf32> to vector<16x32xf32>
    %212 = arith.addf %209, %211 : vector<16x32xf32>
    %213 = vector.shape_cast %212 : vector<16x32xf32> to vector<2x8x32xf32>
    %c0_81 = arith.constant 0 : index
    %c0_82 = arith.constant 0 : index
    %c0_83 = arith.constant 0 : index
    %214 = vector.load %arg20[%c0_81, %c0_82, %c0_83] : memref<2x8x32xf32, #tpu.memory_space<vmem>>, vector<2x8x32xf32>
    tpu.vector_store %arg20[%c0_81, %c0_82, %c0_83], %213 {strides = array<i32>} : memref<2x8x32xf32, #tpu.memory_space<vmem>>, vector<2x8x32xf32>,
    return
  }
  func.func @transform_0(%arg0: i32) -> (i32, i32, i32) {
    %c0_i32 = arith.constant 0 : i32
    %c0_i32_0 = arith.constant 0 : i32
    %c0_i32_1 = arith.constant 0 : i32
    return %arg0, %c0_i32, %c0_i32_0 : i32, i32, i32
  }
  func.func @transform_1(%arg0: i32) -> (i32, i32, i32) {
    %c0_i32 = arith.constant 0 : i32
    %c0_i32_0 = arith.constant 0 : i32
    %c0_i32_1 = arith.constant 0 : i32
    return %arg0, %c0_i32, %c0_i32_0 : i32, i32, i32
  }
  func.func @transform_2(%arg0: i32) -> (i32, i32) {
    %c0_i32 = arith.constant 0 : i32
    %c0_i32_0 = arith.constant 0 : i32
    %c0_i32_1 = arith.constant 0 : i32
    return %c0_i32, %c0_i32_0 : i32, i32
  }
  func.func @transform_3(%arg0: i32) -> (i32, i32) {
    %c0_i32 = arith.constant 0 : i32
    %c0_i32_0 = arith.constant 0 : i32
    %c0_i32_1 = arith.constant 0 : i32
    return %c0_i32, %c0_i32_0 : i32, i32
  }
  func.func @transform_4(%arg0: i32) -> (i32, i32) {
    %c0_i32 = arith.constant 0 : i32
    %c0_i32_0 = arith.constant 0 : i32
    %c0_i32_1 = arith.constant 0 : i32
    return %c0_i32, %c0_i32_0 : i32, i32
  }
  func.func @transform_5(%arg0: i32) -> (i32, i32) {
    %c0_i32 = arith.constant 0 : i32
    %c0_i32_0 = arith.constant 0 : i32
    %c0_i32_1 = arith.constant 0 : i32
    return %c0_i32, %c0_i32_0 : i32, i32
  }
  func.func @transform_6(%arg0: i32) -> (i32, i32) {
    %c0_i32 = arith.constant 0 : i32
    %c0_i32_0 = arith.constant 0 : i32
    %c0_i32_1 = arith.constant 0 : i32
    return %c0_i32, %c0_i32_0 : i32, i32
  }
  func.func @transform_7(%arg0: i32) -> (i32, i32) {
    %c0_i32 = arith.constant 0 : i32
    %c0_i32_0 = arith.constant 0 : i32
    %c0_i32_1 = arith.constant 0 : i32
    return %c0_i32, %c0_i32_0 : i32, i32
  }
  func.func @transform_8(%arg0: i32) -> (i32, i32) {
    %c0_i32 = arith.constant 0 : i32
    %c0_i32_0 = arith.constant 0 : i32
    %c0_i32_1 = arith.constant 0 : i32
    return %c0_i32, %c0_i32_0 : i32, i32
  }
  func.func @transform_9(%arg0: i32) -> (i32, i32) {
    %c0_i32 = arith.constant 0 : i32
    %c0_i32_0 = arith.constant 0 : i32
    %c0_i32_1 = arith.constant 0 : i32
    return %c0_i32, %c0_i32_0 : i32, i32
  }
  func.func @transform_10(%arg0: i32) -> (i32, i32) {
    %c0_i32 = arith.constant 0 : i32
    %c0_i32_0 = arith.constant 0 : i32
    %c0_i32_1 = arith.constant 0 : i32
    return %c0_i32, %c0_i32_0 : i32, i32
  }
  func.func @transform_11(%arg0: i32) -> (i32, i32) {
    %c0_i32 = arith.constant 0 : i32
    %c0_i32_0 = arith.constant 0 : i32
    %c0_i32_1 = arith.constant 0 : i32
    return %c0_i32, %c0_i32_0 : i32, i32
  }
  func.func @transform_12(%arg0: i32) -> (i32, i32) {
    %c0_i32 = arith.constant 0 : i32
    %c0_i32_0 = arith.constant 0 : i32
    %c0_i32_1 = arith.constant 0 : i32
    return %c0_i32, %c0_i32_0 : i32, i32
  }
  func.func @transform_13(%arg0: i32) -> (i32, i32) {
    %c0_i32 = arith.constant 0 : i32
    %c0_i32_0 = arith.constant 0 : i32
    %c0_i32_1 = arith.constant 0 : i32
    return %c0_i32, %c0_i32_0 : i32, i32
  }
  func.func @transform_14(%arg0: i32) -> (i32, i32) {
    %c0_i32 = arith.constant 0 : i32
    %c0_i32_0 = arith.constant 0 : i32
    %c0_i32_1 = arith.constant 0 : i32
    return %c0_i32, %c0_i32_0 : i32, i32
  }
  func.func @transform_15(%arg0: i32) -> (i32, i32) {
    %c0_i32 = arith.constant 0 : i32
    %c0_i32_0 = arith.constant 0 : i32
    %c0_i32_1 = arith.constant 0 : i32
    return %c0_i32, %c0_i32_0 : i32, i32
  }
  func.func @transform_16(%arg0: i32) -> (i32, i32) {
    %c0_i32 = arith.constant 0 : i32
    %c0_i32_0 = arith.constant 0 : i32
    %c0_i32_1 = arith.constant 0 : i32
    return %c0_i32, %c0_i32_0 : i32, i32
  }
  func.func @transform_17(%arg0: i32) -> (i32, i32) {
    %c0_i32 = arith.constant 0 : i32
    %c0_i32_0 = arith.constant 0 : i32
    %c0_i32_1 = arith.constant 0 : i32
    return %c0_i32, %c0_i32_0 : i32, i32
  }
  func.func @transform_18(%arg0: i32) -> (i32, i32) {
    %c0_i32 = arith.constant 0 : i32
    %c0_i32_0 = arith.constant 0 : i32
    %c0_i32_1 = arith.constant 0 : i32
    return %c0_i32, %c0_i32_0 : i32, i32
  }
  func.func @transform_19(%arg0: i32) -> (i32, i32, i32) {
    %c0_i32 = arith.constant 0 : i32
    %c0_i32_0 = arith.constant 0 : i32
    %c0_i32_1 = arith.constant 0 : i32
    return %arg0, %c0_i32, %c0_i32_0 : i32, i32, i32
  }
}

</mosaic_0001>

<llo_original>
// kernel: tpu_custom_call.1
$region0: #{tpu_custom_call.1}
  #allocation0 [shape = 'u32[]', space=smem, size = 0x4, offset = 0x4, fixed_abs, tag = 'smem constant byte address 0x4 - core index']
  #allocation1 [shape = 'u32[144,128]{1,0:T(1,128)}', space=vmem, size = 0x12000, scoped, tag = 'internal scratch']
  %s0 = inlined_call_operand.vmem [shape: f32[4,8,32], index: 0, kind: input, shape index: {}]
  %s1 = inlined_call_operand.hbm [shape: f32[4,16,32], index: 1, kind: input, shape index: {}]
  %s2 = inlined_call_operand.hbm [shape: f32[3,32], index: 2, kind: input, shape index: {}]
  %s3 = inlined_call_operand.vmem [shape: f32[1,32], index: 3, kind: input, shape index: {}]
  %s4 = inlined_call_operand.hbm [shape: f32[1,32], index: 4, kind: input, shape index: {}]
  %s5 = inlined_call_operand.vmem [shape: bf16[32,32], index: 5, kind: input, shape index: {}]
  %s6 = inlined_call_operand.hbm [shape: f32[1,32], index: 6, kind: input, shape index: {}]
  %s7 = inlined_call_operand.hbm [shape: bf16[32,64], index: 7, kind: input, shape index: {}]
  %s8 = inlined_call_operand.hbm [shape: f32[1,64], index: 8, kind: input, shape index: {}]
  %s9 = inlined_call_operand.vmem [shape: bf16[32,32], index: 9, kind: input, shape index: {}]
  %s10 = inlined_call_operand.hbm [shape: f32[1,32], index: 10, kind: input, shape index: {}]
  %s11 = inlined_call_operand.hbm [shape: f32[1,32], index: 11, kind: input, shape index: {}]
  %s12 = inlined_call_operand.hbm [shape: f32[1,32], index: 12, kind: input, shape index: {}]
  %s13 = inlined_call_operand.vmem [shape: bf16[32,64], index: 13, kind: input, shape index: {}]
  %s14 = inlined_call_operand.vmem [shape: f32[1,64], index: 14, kind: input, shape index: {}]
  %s15 = inlined_call_operand.vmem [shape: bf16[64,32], index: 15, kind: input, shape index: {}]
  %s16 = inlined_call_operand.vmem [shape: f32[1,32], index: 16, kind: input, shape index: {}]
  %s17 = inlined_call_operand.vmem [shape: f32[1,32], index: 17, kind: input, shape index: {}]
  %s18 = inlined_call_operand.vmem [shape: f32[1,32], index: 18, kind: input, shape index: {}]
  %s19 = inlined_call_operand.hbm [shape: f32[4,8,32], index: 19, kind: output, shape index: {}]
  %s20 = sld [smem:[#allocation0]]
  $region145: #{tpu_custom_call.1} parent=0
    _
  %s22 = ssub.s32 1, %s20
  %s23 = scalar_select 0, %s22, %s20
  $region1: #{tpu_custom_call.1} parent=0
    #allocation2 [shape = 'u8[32768]{0}', space=vmem, size = 0x8000, scoped, tag = 'input window, operand 1']
    #allocation3 [shape = 's32[2]{0}', space=sflag, size = 0x8, scoped, tag = 'scoped memory for tpu_custom_call.1']
    #allocation4 [shape = 's32[2]{0}', space=sflag, size = 0x8, scoped, tag = 'scoped memory for tpu_custom_call.1']
    #allocation5 [shape = 'u8[2048]{0}', space=vmem, size = 0x800, scoped, tag = 'input window, operand 2, single buffered']
    #allocation6 [shape = 's32[1]{0}', space=sflag, size = 0x4, scoped, tag = 'scoped memory for tpu_custom_call.1']
    #allocation7 [shape = 'u8[512]{0}', space=vmem, size = 0x400, scoped, tag = 'input window, operand 4, single buffered']
    #allocation8 [shape = 'u8[512]{0}', space=vmem, size = 0x400, scoped, tag = 'input window, operand 6, single buffered']
    #allocation9 [shape = 's32[1]{0}', space=sflag, size = 0x4, scoped, tag = 'scoped memory for tpu_custom_call.1']
    #allocation10 [shape = 'u8[8192]{0}', space=vmem, size = 0x2000, scoped, tag = 'input window, operand 7, single buffered']
    #allocation11 [shape = 'u8[512]{0}', space=vmem, size = 0x400, scoped, tag = 'input window, operand 8, single buffered']
    #allocation12 [shape = 's32[1]{0}', space=sflag, size = 0x4, scoped, tag = 'scoped memory for tpu_custom_call.1']
    #allocation13 [shape = 'u8[512]{0}', space=vmem, size = 0x400, scoped, tag = 'input window, operand 10, single buffered']
    #allocation14 [shape = 'u8[512]{0}', space=vmem, size = 0x400, scoped, tag = 'input window, operand 11, single buffered']
    #allocation15 [shape = 's32[1]{0}', space=sflag, size = 0x4, scoped, tag = 'scoped memory for tpu_custom_call.1']
    #allocation16 [shape = 'u8[512]{0}', space=vmem, size = 0x400, scoped, tag = 'input window, operand 12, single buffered']
    #allocation17 [shape = 'u8[16384]{0}', space=vmem, size = 0x4000, scoped, tag = 'output window, operand 0']
    %24 = vsyncpa [#allocation3], 0
    %s25 = scalar_lea.sflag [#allocation3], 1
    %26 = vsyncpa %s25, 0
    %27 = vsyncpa [#allocation6], 0
    %28 = vsyncpa [#allocation9], 0
    %29 = vsyncpa [#allocation12], 0
    %30 = vsyncpa [#allocation15], 0
    %31 = vsyncpa [#allocation4], 0
    %s32 = scalar_lea.sflag [#allocation4], 1
    %33 = vsyncpa %s32, 0
    loop: start=0, step=1, limit=4
    $region2: #{tpu_custom_call.1} parent=1 // loop_pre_header
      _
    $region3: #{tpu_custom_call.1} parent=1 // loop_header
      %s35 = sphi 0, %s39
      %p36 = scmp.ge.s32.totalorder %s35, 4
      %s45 = sphi 0, %s47
      %s48 = sphi 0, %s45
      %s49 = sphi 0, %s48
      %s65 = sphi 0, %s49
      %s71 = sphi 0, %s73
      %s74 = sphi 0, %s71
      %s75 = sphi 0, %s74
      %s91 = sphi 0, %s75
      %s95 = sphi 0, %s95
      %s97 = sphi 0, %s95
      %s98 = sphi 0, %s97
      %s112 = sphi 0, %s98
      %s116 = sphi 0, %s116
      %s118 = sphi 0, %s116
      %s119 = sphi 0, %s118
      %s133 = sphi 0, %s119
      %s137 = sphi 0, %s137
      %s139 = sphi 0, %s137
      %s140 = sphi 0, %s139
      %s154 = sphi 0, %s140
      %s158 = sphi 0, %s158
      %s160 = sphi 0, %s158
      %s161 = sphi 0, %s160
      %s175 = sphi 0, %s161
      %s179 = sphi 0, %s179
      %s181 = sphi 0, %s179
      %s182 = sphi 0, %s181
      %s196 = sphi 0, %s182
      %s200 = sphi 0, %s200
      %s202 = sphi 0, %s200
      %s203 = sphi 0, %s202
      %s217 = sphi 0, %s203
      %s221 = sphi 0, %s221
      %s223 = sphi 0, %s221
      %s224 = sphi 0, %s223
      %s238 = sphi 0, %s224
      %s242 = sphi 0, %s242
      %s244 = sphi 0, %s242
      %s245 = sphi 0, %s244
      %s259 = sphi 0, %s245
      %s263 = sphi 0, %s263
      %s265 = sphi 0, %s263
      %s266 = sphi 0, %s265
      %s280 = sphi 0, %s266
      %s284 = sphi 0, %s284
      %s286 = sphi 0, %s284
      %s287 = sphi 0, %s286
      %s301 = sphi 0, %s287
      %s305 = sphi 0, %s305
      %s307 = sphi 0, %s305
      %s308 = sphi 0, %s307
      %s322 = sphi 0, %s308
      %s326 = sphi 0, %s326
      %s328 = sphi 0, %s326
      %s329 = sphi 0, %s328
      %s343 = sphi 0, %s329
      %s347 = sphi 0, %s347
      %s349 = sphi 0, %s347
      %s350 = sphi 0, %s349
      %s364 = sphi 0, %s350
      %s368 = sphi 0, %s368
      %s370 = sphi 0, %s368
      %s371 = sphi 0, %s370
      %s385 = sphi 0, %s371
      %s389 = sphi 0, %s389
      %s391 = sphi 0, %s389
      %s392 = sphi 0, %s391
      %s406 = sphi 0, %s392
      %s410 = sphi 0, %s410
      %s412 = sphi 0, %s410
      %s413 = sphi 0, %s412
      %s427 = sphi 0, %s413
      %s431 = sphi 0, %s431
      %s433 = sphi 0, %s431
      %s434 = sphi 0, %s433
      %s448 = sphi 0, %s434
      %s454 = sphi 0, %s456
      %s457 = sphi 0, %s454
      %s458 = sphi 0, %s457
      %s474 = sphi 0, %s458
    $region4: #{tpu_custom_call.1} parent=1 // loop_header_branch
      %38 = sbr.rel (%p36) target = $region8
    $region5: #{tpu_custom_call.1} parent=1 // loop_body
      %s40 = ssub.s32 %s35, 1
      %s41 = ssub.s32 %s35, 2
      %s42 = sadd.s32 %s35, 1
      %s43 = ssub.s32 %s35, %s42
      %p44 = scmp.eq.s32.totalorder %s43, 0
      %s46 = sadd.s32 %s45, 1
      %s47 = scalar_select %p44, %s45, %s46
      %p50 = pneg %p44
      %p51 = scmp.eq.s32.totalorder %s35, 1
      %p52 = por %p50, %p51
      %p53 = scmp.ne.s32.totalorder %s45, %s48
      %p54 = scmp.eq.s32.totalorder %s35, 0
      %p55 = por %p53, %p54
      %p56 = scmp.ne.s32.totalorder %s45, %s48
      %p57 = scmp.eq.s32.totalorder %s40, 1
      %p58 = por %p56, %p57
      %p59 = scmp.ne.s32.totalorder %s48, %s49
      %p60 = scmp.eq.s32.totalorder %s40, 0
      %p61 = por %p59, %p60
      %p62 = scmp.ne.s32.totalorder %s48, %s49
      %p63 = scmp.eq.s32.totalorder %s41, 1
      %p64 = por %p62, %p63
      %p66 = scmp.ne.s32.totalorder %s49, %s65
      %p67 = scmp.eq.s32.totalorder %s41, 0
      %p68 = por %p66, %p67
      %s69 = ssub.s32 %s35, %s42
      %p70 = scmp.eq.s32.totalorder %s69, 0
      %s72 = sadd.s32 %s71, 1
      %s73 = scalar_select %p70, %s71, %s72
      %p76 = pneg %p70
      %p77 = scmp.eq.s32.totalorder %s35, 1
      %p78 = por %p76, %p77
      %p79 = scmp.ne.s32.totalorder %s71, %s74
      %p80 = scmp.eq.s32.totalorder %s35, 0
      %p81 = por %p79, %p80
      %p82 = scmp.ne.s32.totalorder %s71, %s74
      %p83 = scmp.eq.s32.totalorder %s40, 1
      %p84 = por %p82, %p83
      %p85 = scmp.ne.s32.totalorder %s74, %s75
      %p86 = scmp.eq.s32.totalorder %s40, 0
      %p87 = por %p85, %p86
      %p88 = scmp.ne.s32.totalorder %s74, %s75
      %p89 = scmp.eq.s32.totalorder %s41, 1
      %p90 = por %p88, %p89
      %p92 = scmp.ne.s32.totalorder %s75, %s91
      %p93 = scmp.eq.s32.totalorder %s41, 0
      %p94 = por %p92, %p93
      %s96 = sadd.s32 %s95, 1
      %p99 = scmp.eq.s32.totalorder %s35, 1
      %p100 = scmp.ne.s32.totalorder %s95, %s97
      %p101 = scmp.eq.s32.totalorder %s35, 0
      %p102 = por %p100, %p101
      %p103 = scmp.ne.s32.totalorder %s95, %s97
      %p104 = scmp.eq.s32.totalorder %s40, 1
      %p105 = por %p103, %p104
      %p106 = scmp.ne.s32.totalorder %s97, %s98
      %p107 = scmp.eq.s32.totalorder %s40, 0
      %p108 = por %p106, %p107
      %p109 = scmp.ne.s32.totalorder %s97, %s98
      %p110 = scmp.eq.s32.totalorder %s41, 1
      %p111 = por %p109, %p110
      %p113 = scmp.ne.s32.totalorder %s98, %s112
      %p114 = scmp.eq.s32.totalorder %s41, 0
      %p115 = por %p113, %p114
      %s117 = sadd.s32 %s116, 1
      %p120 = scmp.eq.s32.totalorder %s35, 1
      %p121 = scmp.ne.s32.totalorder %s116, %s118
      %p122 = scmp.eq.s32.totalorder %s35, 0
      %p123 = por %p121, %p122
      %p124 = scmp.ne.s32.totalorder %s116, %s118
      %p125 = scmp.eq.s32.totalorder %s40, 1
      %p126 = por %p124, %p125
      %p127 = scmp.ne.s32.totalorder %s118, %s119
      %p128 = scmp.eq.s32.totalorder %s40, 0
      %p129 = por %p127, %p128
      %p130 = scmp.ne.s32.totalorder %s118, %s119
      %p131 = scmp.eq.s32.totalorder %s41, 1
      %p132 = por %p130, %p131
      %p134 = scmp.ne.s32.totalorder %s119, %s133
      %p135 = scmp.eq.s32.totalorder %s41, 0
      %p136 = por %p134, %p135
      %s138 = sadd.s32 %s137, 1
      %p141 = scmp.eq.s32.totalorder %s35, 1
      %p142 = scmp.ne.s32.totalorder %s137, %s139
      %p143 = scmp.eq.s32.totalorder %s35, 0
      %p144 = por %p142, %p143
      %p145 = scmp.ne.s32.totalorder %s137, %s139
      %p146 = scmp.eq.s32.totalorder %s40, 1
      %p147 = por %p145, %p146
      %p148 = scmp.ne.s32.totalorder %s139, %s140
      %p149 = scmp.eq.s32.totalorder %s40, 0
      %p150 = por %p148, %p149
      %p151 = scmp.ne.s32.totalorder %s139, %s140
      %p152 = scmp.eq.s32.totalorder %s41, 1
      %p153 = por %p151, %p152
      %p155 = scmp.ne.s32.totalorder %s140, %s154
      %p156 = scmp.eq.s32.totalorder %s41, 0
      %p157 = por %p155, %p156
      %s159 = sadd.s32 %s158, 1
      %p162 = scmp.eq.s32.totalorder %s35, 1
      %p163 = scmp.ne.s32.totalorder %s158, %s160
      %p164 = scmp.eq.s32.totalorder %s35, 0
      %p165 = por %p163, %p164
      %p166 = scmp.ne.s32.totalorder %s158, %s160
      %p167 = scmp.eq.s32.totalorder %s40, 1
      %p168 = por %p166, %p167
      %p169 = scmp.ne.s32.totalorder %s160, %s161
      %p170 = scmp.eq.s32.totalorder %s40, 0
      %p171 = por %p169, %p170
      %p172 = scmp.ne.s32.totalorder %s160, %s161
      %p173 = scmp.eq.s32.totalorder %s41, 1
      %p174 = por %p172, %p173
      %p176 = scmp.ne.s32.totalorder %s161, %s175
      %p177 = scmp.eq.s32.totalorder %s41, 0
      %p178 = por %p176, %p177
      %s180 = sadd.s32 %s179, 1
      %p183 = scmp.eq.s32.totalorder %s35, 1
      %p184 = scmp.ne.s32.totalorder %s179, %s181
      %p185 = scmp.eq.s32.totalorder %s35, 0
      %p186 = por %p184, %p185
      %p187 = scmp.ne.s32.totalorder %s179, %s181
      %p188 = scmp.eq.s32.totalorder %s40, 1
      %p189 = por %p187, %p188
      %p190 = scmp.ne.s32.totalorder %s181, %s182
      %p191 = scmp.eq.s32.totalorder %s40, 0
      %p192 = por %p190, %p191
      %p193 = scmp.ne.s32.totalorder %s181, %s182
      %p194 = scmp.eq.s32.totalorder %s41, 1
      %p195 = por %p193, %p194
      %p197 = scmp.ne.s32.totalorder %s182, %s196
      %p198 = scmp.eq.s32.totalorder %s41, 0
      %p199 = por %p197, %p198
      %s201 = sadd.s32 %s200, 1
      %p204 = scmp.eq.s32.totalorder %s35, 1
      %p205 = scmp.ne.s32.totalorder %s200, %s202
      %p206 = scmp.eq.s32.totalorder %s35, 0
      %p207 = por %p205, %p206
      %p208 = scmp.ne.s32.totalorder %s200, %s202
      %p209 = scmp.eq.s32.totalorder %s40, 1
      %p210 = por %p208, %p209
      %p211 = scmp.ne.s32.totalorder %s202, %s203
      %p212 = scmp.eq.s32.totalorder %s40, 0
      %p213 = por %p211, %p212
      %p214 = scmp.ne.s32.totalorder %s202, %s203
      %p215 = scmp.eq.s32.totalorder %s41, 1
      %p216 = por %p214, %p215
      %p218 = scmp.ne.s32.totalorder %s203, %s217
      %p219 = scmp.eq.s32.totalorder %s41, 0
      %p220 = por %p218, %p219
      %s222 = sadd.s32 %s221, 1
      %p225 = scmp.eq.s32.totalorder %s35, 1
      %p226 = scmp.ne.s32.totalorder %s221, %s223
      %p227 = scmp.eq.s32.totalorder %s35, 0
      %p228 = por %p226, %p227
      %p229 = scmp.ne.s32.totalorder %s221, %s223
      %p230 = scmp.eq.s32.totalorder %s40, 1
      %p231 = por %p229, %p230
      %p232 = scmp.ne.s32.totalorder %s223, %s224
      %p233 = scmp.eq.s32.totalorder %s40, 0
      %p234 = por %p232, %p233
      %p235 = scmp.ne.s32.totalorder %s223, %s224
      %p236 = scmp.eq.s32.totalorder %s41, 1
      %p237 = por %p235, %p236
      %p239 = scmp.ne.s32.totalorder %s224, %s238
      %p240 = scmp.eq.s32.totalorder %s41, 0
      %p241 = por %p239, %p240
      %s243 = sadd.s32 %s242, 1
      %p246 = scmp.eq.s32.totalorder %s35, 1
      %p247 = scmp.ne.s32.totalorder %s242, %s244
      %p248 = scmp.eq.s32.totalorder %s35, 0
      %p249 = por %p247, %p248
      %p250 = scmp.ne.s32.totalorder %s242, %s244
      %p251 = scmp.eq.s32.totalorder %s40, 1
      %p252 = por %p250, %p251
      %p253 = scmp.ne.s32.totalorder %s244, %s245
      %p254 = scmp.eq.s32.totalorder %s40, 0
      %p255 = por %p253, %p254
      %p256 = scmp.ne.s32.totalorder %s244, %s245
      %p257 = scmp.eq.s32.totalorder %s41, 1
      %p258 = por %p256, %p257
      %p260 = scmp.ne.s32.totalorder %s245, %s259
      %p261 = scmp.eq.s32.totalorder %s41, 0
      %p262 = por %p260, %p261
      %s264 = sadd.s32 %s263, 1
      %p267 = scmp.eq.s32.totalorder %s35, 1
      %p268 = scmp.ne.s32.totalorder %s263, %s265
      %p269 = scmp.eq.s32.totalorder %s35, 0
      %p270 = por %p268, %p269
      %p271 = scmp.ne.s32.totalorder %s263, %s265
      %p272 = scmp.eq.s32.totalorder %s40, 1
      %p273 = por %p271, %p272
      %p274 = scmp.ne.s32.totalorder %s265, %s266
      %p275 = scmp.eq.s32.totalorder %s40, 0
      %p276 = por %p274, %p275
      %p277 = scmp.ne.s32.totalorder %s265, %s266
      %p278 = scmp.eq.s32.totalorder %s41, 1
      %p279 = por %p277, %p278
      %p281 = scmp.ne.s32.totalorder %s266, %s280
      %p282 = scmp.eq.s32.totalorder %s41, 0
      %p283 = por %p281, %p282
      %s285 = sadd.s32 %s284, 1
      %p288 = scmp.eq.s32.totalorder %s35, 1
      %p289 = scmp.ne.s32.totalorder %s284, %s286
      %p290 = scmp.eq.s32.totalorder %s35, 0
      %p291 = por %p289, %p290
      %p292 = scmp.ne.s32.totalorder %s284, %s286
      %p293 = scmp.eq.s32.totalorder %s40, 1
      %p294 = por %p292, %p293
      %p295 = scmp.ne.s32.totalorder %s286, %s287
      %p296 = scmp.eq.s32.totalorder %s40, 0
      %p297 = por %p295, %p296
      %p298 = scmp.ne.s32.totalorder %s286, %s287
      %p299 = scmp.eq.s32.totalorder %s41, 1
      %p300 = por %p298, %p299
      %p302 = scmp.ne.s32.totalorder %s287, %s301
      %p303 = scmp.eq.s32.totalorder %s41, 0
      %p304 = por %p302, %p303
      %s306 = sadd.s32 %s305, 1
      %p309 = scmp.eq.s32.totalorder %s35, 1
      %p310 = scmp.ne.s32.totalorder %s305, %s307
      %p311 = scmp.eq.s32.totalorder %s35, 0
      %p312 = por %p310, %p311
      %p313 = scmp.ne.s32.totalorder %s305, %s307
      %p314 = scmp.eq.s32.totalorder %s40, 1
      %p315 = por %p313, %p314
      %p316 = scmp.ne.s32.totalorder %s307, %s308
      %p317 = scmp.eq.s32.totalorder %s40, 0
      %p318 = por %p316, %p317
      %p319 = scmp.ne.s32.totalorder %s307, %s308
      %p320 = scmp.eq.s32.totalorder %s41, 1
      %p321 = por %p319, %p320
      %p323 = scmp.ne.s32.totalorder %s308, %s322
      %p324 = scmp.eq.s32.totalorder %s41, 0
      %p325 = por %p323, %p324
      %s327 = sadd.s32 %s326, 1
      %p330 = scmp.eq.s32.totalorder %s35, 1
      %p331 = scmp.ne.s32.totalorder %s326, %s328
      %p332 = scmp.eq.s32.totalorder %s35, 0
      %p333 = por %p331, %p332
      %p334 = scmp.ne.s32.totalorder %s326, %s328
      %p335 = scmp.eq.s32.totalorder %s40, 1
      %p336 = por %p334, %p335
      %p337 = scmp.ne.s32.totalorder %s328, %s329
      %p338 = scmp.eq.s32.totalorder %s40, 0
      %p339 = por %p337, %p338
      %p340 = scmp.ne.s32.totalorder %s328, %s329
      %p341 = scmp.eq.s32.totalorder %s41, 1
      %p342 = por %p340, %p341
      %p344 = scmp.ne.s32.totalorder %s329, %s343
      %p345 = scmp.eq.s32.totalorder %s41, 0
      %p346 = por %p344, %p345
      %s348 = sadd.s32 %s347, 1
      %p351 = scmp.eq.s32.totalorder %s35, 1
      %p352 = scmp.ne.s32.totalorder %s347, %s349
      %p353 = scmp.eq.s32.totalorder %s35, 0
      %p354 = por %p352, %p353
      %p355 = scmp.ne.s32.totalorder %s347, %s349
      %p356 = scmp.eq.s32.totalorder %s40, 1
      %p357 = por %p355, %p356
      %p358 = scmp.ne.s32.totalorder %s349, %s350
      %p359 = scmp.eq.s32.totalorder %s40, 0
      %p360 = por %p358, %p359
      %p361 = scmp.ne.s32.totalorder %s349, %s350
      %p362 = scmp.eq.s32.totalorder %s41, 1
      %p363 = por %p361, %p362
      %p365 = scmp.ne.s32.totalorder %s350, %s364
      %p366 = scmp.eq.s32.totalorder %s41, 0
      %p367 = por %p365, %p366
      %s369 = sadd.s32 %s368, 1
      %p372 = scmp.eq.s32.totalorder %s35, 1
      %p373 = scmp.ne.s32.totalorder %s368, %s370
      %p374 = scmp.eq.s32.totalorder %s35, 0
      %p375 = por %p373, %p374
      %p376 = scmp.ne.s32.totalorder %s368, %s370
      %p377 = scmp.eq.s32.totalorder %s40, 1
      %p378 = por %p376, %p377
      %p379 = scmp.ne.s32.totalorder %s370, %s371
      %p380 = scmp.eq.s32.totalorder %s40, 0
      %p381 = por %p379, %p380
      %p382 = scmp.ne.s32.totalorder %s370, %s371
      %p383 = scmp.eq.s32.totalorder %s41, 1
      %p384 = por %p382, %p383
      %p386 = scmp.ne.s32.totalorder %s371, %s385
      %p387 = scmp.eq.s32.totalorder %s41, 0
      %p388 = por %p386, %p387
      %s390 = sadd.s32 %s389, 1
      %p393 = scmp.eq.s32.totalorder %s35, 1
      %p394 = scmp.ne.s32.totalorder %s389, %s391
      %p395 = scmp.eq.s32.totalorder %s35, 0
      %p396 = por %p394, %p395
      %p397 = scmp.ne.s32.totalorder %s389, %s391
      %p398 = scmp.eq.s32.totalorder %s40, 1
      %p399 = por %p397, %p398
      %p400 = scmp.ne.s32.totalorder %s391, %s392
      %p401 = scmp.eq.s32.totalorder %s40, 0
      %p402 = por %p400, %p401
      %p403 = scmp.ne.s32.totalorder %s391, %s392
      %p404 = scmp.eq.s32.totalorder %s41, 1
      %p405 = por %p403, %p404
      %p407 = scmp.ne.s32.totalorder %s392, %s406
      %p408 = scmp.eq.s32.totalorder %s41, 0
      %p409 = por %p407, %p408
      %s411 = sadd.s32 %s410, 1
      %p414 = scmp.eq.s32.totalorder %s35, 1
      %p415 = scmp.ne.s32.totalorder %s410, %s412
      %p416 = scmp.eq.s32.totalorder %s35, 0
      %p417 = por %p415, %p416
      %p418 = scmp.ne.s32.totalorder %s410, %s412
      %p419 = scmp.eq.s32.totalorder %s40, 1
      %p420 = por %p418, %p419
      %p421 = scmp.ne.s32.totalorder %s412, %s413
      %p422 = scmp.eq.s32.totalorder %s40, 0
      %p423 = por %p421, %p422
      %p424 = scmp.ne.s32.totalorder %s412, %s413
      %p425 = scmp.eq.s32.totalorder %s41, 1
      %p426 = por %p424, %p425
      %p428 = scmp.ne.s32.totalorder %s413, %s427
      %p429 = scmp.eq.s32.totalorder %s41, 0
      %p430 = por %p428, %p429
      %s432 = sadd.s32 %s431, 1
      %p435 = scmp.eq.s32.totalorder %s35, 1
      %p436 = scmp.ne.s32.totalorder %s431, %s433
      %p437 = scmp.eq.s32.totalorder %s35, 0
      %p438 = por %p436, %p437
      %p439 = scmp.ne.s32.totalorder %s431, %s433
      %p440 = scmp.eq.s32.totalorder %s40, 1
      %p441 = por %p439, %p440
      %p442 = scmp.ne.s32.totalorder %s433, %s434
      %p443 = scmp.eq.s32.totalorder %s40, 0
      %p444 = por %p442, %p443
      %p445 = scmp.ne.s32.totalorder %s433, %s434
      %p446 = scmp.eq.s32.totalorder %s41, 1
      %p447 = por %p445, %p446
      %p449 = scmp.ne.s32.totalorder %s434, %s448
      %p450 = scmp.eq.s32.totalorder %s41, 0
      %p451 = por %p449, %p450
      %s452 = ssub.s32 %s35, %s42
      %p453 = scmp.eq.s32.totalorder %s452, 0
      %s455 = sadd.s32 %s454, 1
      %s456 = scalar_select %p453, %s454, %s455
      %p459 = pneg %p453
      %p460 = scmp.eq.s32.totalorder %s35, 1
      %p461 = por %p459, %p460
      %p462 = scmp.ne.s32.totalorder %s454, %s457
      %p463 = scmp.eq.s32.totalorder %s35, 0
      %p464 = por %p462, %p463
      %p465 = scmp.ne.s32.totalorder %s454, %s457
      %p466 = scmp.eq.s32.totalorder %s40, 1
      %p467 = por %p465, %p466
      %p468 = scmp.ne.s32.totalorder %s457, %s458
      %p469 = scmp.eq.s32.totalorder %s40, 0
      %p470 = por %p468, %p469
      %p471 = scmp.ne.s32.totalorder %s457, %s458
      %p472 = scmp.eq.s32.totalorder %s41, 1
      %p473 = por %p471, %p472
      %p475 = scmp.ne.s32.totalorder %s458, %s474
      %p476 = scmp.eq.s32.totalorder %s41, 0
      %p477 = por %p475, %p476
      %p478 = scmp.le.s32.totalorder 1, %s35
      %p479 = scmp.lt.s32.totalorder %s35, 3
      %p480 = pnand %p478, %p479
      %p481 = pneg %p480
      // Predicated region
      $region9: #{tpu_custom_call.1} parent=5 // pred_check
        _
      $region10: #{tpu_custom_call.1} parent=5 // pred_check_branch
        %483 = sbr.rel (%p480) target = $region12
      $region11: #{tpu_custom_call.1} parent=5 // pred_region
        %s484 = ssub.s32 %s35, 1
        // Predicated region
        $region13: #{tpu_custom_call.1} parent=11 // pred_check
          %p485 = pneg %p108
        $region14: #{tpu_custom_call.1} parent=11 // pred_check_branch
          %487 = sbr.rel (%p485) target = $region16
        $region15: #{tpu_custom_call.1} parent=11 // pred_region
          %s489 = ssub.s32 64, 64
          %490 = vsyncadd [#allocation6], %s489
          %s492 = sshll.u32 [#allocation5], 4
          %s493 = int_to_ptr.vmem [resolvable:$true] %s492
          %495 = dma.hbm_to_vmem [thread:$0]  %s2, 64, %s493, [#allocation6]
        $region16: #{tpu_custom_call.1} parent=11 // pred_fallthru
          _
        // Predicated region
        $region17: #{tpu_custom_call.1} parent=11 // pred_check
          %p496 = pneg %p129
        $region18: #{tpu_custom_call.1} parent=11 // pred_check_branch
          %498 = sbr.rel (%p496) target = $region20
        $region19: #{tpu_custom_call.1} parent=11 // pred_region
          _
        $region20: #{tpu_custom_call.1} parent=11 // pred_fallthru
          _
        // Predicated region
        $region21: #{tpu_custom_call.1} parent=11 // pred_check
          %p499 = pneg %p150
        $region22: #{tpu_custom_call.1} parent=11 // pred_check_branch
          %501 = sbr.rel (%p499) target = $region24
        $region23: #{tpu_custom_call.1} parent=11 // pred_region
          %s503 = ssub.s32 16, 16
          %504 = vsyncadd [#allocation6], %s503
          %s506 = sshll.u32 [#allocation7], 4
          %s507 = int_to_ptr.vmem [resolvable:$true] %s506
          %509 = dma.hbm_to_vmem [thread:$0]  %s4, 16, %s507, [#allocation6]
        $region24: #{tpu_custom_call.1} parent=11 // pred_fallthru
          _
        // Predicated region
        $region25: #{tpu_custom_call.1} parent=11 // pred_check
          %p510 = pneg %p171
        $region26: #{tpu_custom_call.1} parent=11 // pred_check_branch
          %512 = sbr.rel (%p510) target = $region28
        $region27: #{tpu_custom_call.1} parent=11 // pred_region
          _
        $region28: #{tpu_custom_call.1} parent=11 // pred_fallthru
          _
        // Predicated region
        $region29: #{tpu_custom_call.1} parent=11 // pred_check
          %p513 = pneg %p192
        $region30: #{tpu_custom_call.1} parent=11 // pred_check_branch
          %515 = sbr.rel (%p513) target = $region32
        $region31: #{tpu_custom_call.1} parent=11 // pred_region
          %s517 = ssub.s32 16, 16
          %518 = vsyncadd [#allocation9], %s517
          %s520 = sshll.u32 [#allocation8], 4
          %s521 = int_to_ptr.vmem [resolvable:$true] %s520
          %523 = dma.hbm_to_vmem [thread:$0]  %s6, 16, %s521, [#allocation9]
        $region32: #{tpu_custom_call.1} parent=11 // pred_fallthru
          _
        // Predicated region
        $region33: #{tpu_custom_call.1} parent=11 // pred_check
          %p524 = pneg %p213
        $region34: #{tpu_custom_call.1} parent=11 // pred_check_branch
          %526 = sbr.rel (%p524) target = $region36
        $region35: #{tpu_custom_call.1} parent=11 // pred_region
          %s528 = ssub.s32 256, 256
          %529 = vsyncadd [#allocation9], %s528
          %s530 = sshll.u32 [#allocation10], 4
          %s531 = int_to_ptr.vmem [resolvable:$true] %s530
          %536 = dma.hbm_to_vmem [thread:$0]  %s7, 256, %s531, [#allocation9], 64, 64, 4
        $region36: #{tpu_custom_call.1} parent=11 // pred_fallthru
          _
        // Predicated region
        $region37: #{tpu_custom_call.1} parent=11 // pred_check
          %p537 = pneg %p234
        $region38: #{tpu_custom_call.1} parent=11 // pred_check_branch
          %539 = sbr.rel (%p537) target = $region40
        $region39: #{tpu_custom_call.1} parent=11 // pred_region
          %s541 = ssub.s32 16, 16
          %542 = vsyncadd [#allocation12], %s541
          %s544 = sshll.u32 [#allocation11], 4
          %s545 = int_to_ptr.vmem [resolvable:$true] %s544
          %547 = dma.hbm_to_vmem [thread:$0]  %s8, 16, %s545, [#allocation12]
        $region40: #{tpu_custom_call.1} parent=11 // pred_fallthru
          _
        // Predicated region
        $region41: #{tpu_custom_call.1} parent=11 // pred_check
          %p548 = pneg %p255
        $region42: #{tpu_custom_call.1} parent=11 // pred_check_branch
          %550 = sbr.rel (%p548) target = $region44
        $region43: #{tpu_custom_call.1} parent=11 // pred_region
          _
        $region44: #{tpu_custom_call.1} parent=11 // pred_fallthru
          _
        // Predicated region
        $region45: #{tpu_custom_call.1} parent=11 // pred_check
          %p551 = pneg %p276
        $region46: #{tpu_custom_call.1} parent=11 // pred_check_branch
          %553 = sbr.rel (%p551) target = $region48
        $region47: #{tpu_custom_call.1} parent=11 // pred_region
          %s555 = ssub.s32 16, 16
          %556 = vsyncadd [#allocation12], %s555
          %s558 = sshll.u32 [#allocation13], 4
          %s559 = int_to_ptr.vmem [resolvable:$true] %s558
          %561 = dma.hbm_to_vmem [thread:$0]  %s10, 16, %s559, [#allocation12]
        $region48: #{tpu_custom_call.1} parent=11 // pred_fallthru
          _
        // Predicated region
        $region49: #{tpu_custom_call.1} parent=11 // pred_check
          %p562 = pneg %p297
        $region50: #{tpu_custom_call.1} parent=11 // pred_check_branch
          %564 = sbr.rel (%p562) target = $region52
        $region51: #{tpu_custom_call.1} parent=11 // pred_region
          %s566 = ssub.s32 16, 16
          %567 = vsyncadd [#allocation15], %s566
          %s569 = sshll.u32 [#allocation14], 4
          %s570 = int_to_ptr.vmem [resolvable:$true] %s569
          %572 = dma.hbm_to_vmem [thread:$0]  %s11, 16, %s570, [#allocation15]
        $region52: #{tpu_custom_call.1} parent=11 // pred_fallthru
          _
        // Predicated region
        $region53: #{tpu_custom_call.1} parent=11 // pred_check
          %p573 = pneg %p318
        $region54: #{tpu_custom_call.1} parent=11 // pred_check_branch
          %575 = sbr.rel (%p573) target = $region56
        $region55: #{tpu_custom_call.1} parent=11 // pred_region
          %s577 = ssub.s32 16, 16
          %578 = vsyncadd [#allocation15], %s577
          %s580 = sshll.u32 [#allocation16], 4
          %s581 = int_to_ptr.vmem [resolvable:$true] %s580
          %583 = dma.hbm_to_vmem [thread:$0]  %s12, 16, %s581, [#allocation15]
        $region56: #{tpu_custom_call.1} parent=11 // pred_fallthru
          _
        // Predicated region
        $region57: #{tpu_custom_call.1} parent=11 // pred_check
          %p584 = pneg %p339
        $region58: #{tpu_custom_call.1} parent=11 // pred_check_branch
          %586 = sbr.rel (%p584) target = $region60
        $region59: #{tpu_custom_call.1} parent=11 // pred_region
          _
        $region60: #{tpu_custom_call.1} parent=11 // pred_fallthru
          _
        // Predicated region
        $region61: #{tpu_custom_call.1} parent=11 // pred_check
          %p587 = pneg %p360
        $region62: #{tpu_custom_call.1} parent=11 // pred_check_branch
          %589 = sbr.rel (%p587) target = $region64
        $region63: #{tpu_custom_call.1} parent=11 // pred_region
          _
        $region64: #{tpu_custom_call.1} parent=11 // pred_fallthru
          _
        // Predicated region
        $region65: #{tpu_custom_call.1} parent=11 // pred_check
          %p590 = pneg %p381
        $region66: #{tpu_custom_call.1} parent=11 // pred_check_branch
          %592 = sbr.rel (%p590) target = $region68
        $region67: #{tpu_custom_call.1} parent=11 // pred_region
          _
        $region68: #{tpu_custom_call.1} parent=11 // pred_fallthru
          _
        // Predicated region
        $region69: #{tpu_custom_call.1} parent=11 // pred_check
          %p593 = pneg %p402
        $region70: #{tpu_custom_call.1} parent=11 // pred_check_branch
          %595 = sbr.rel (%p593) target = $region72
        $region71: #{tpu_custom_call.1} parent=11 // pred_region
          _
        $region72: #{tpu_custom_call.1} parent=11 // pred_fallthru
          _
        // Predicated region
        $region73: #{tpu_custom_call.1} parent=11 // pred_check
          %p596 = pneg %p423
        $region74: #{tpu_custom_call.1} parent=11 // pred_check_branch
          %598 = sbr.rel (%p596) target = $region76
        $region75: #{tpu_custom_call.1} parent=11 // pred_region
          _
        $region76: #{tpu_custom_call.1} parent=11 // pred_fallthru
          _
        // Predicated region
        $region77: #{tpu_custom_call.1} parent=11 // pred_check
          %p599 = pneg %p444
        $region78: #{tpu_custom_call.1} parent=11 // pred_check_branch
          %601 = sbr.rel (%p599) target = $region80
        $region79: #{tpu_custom_call.1} parent=11 // pred_region
          _
        $region80: #{tpu_custom_call.1} parent=11 // pred_fallthru
          _
      $region12: #{tpu_custom_call.1} parent=5 // pred_fallthru
        _
      %p602 = scmp.lt.s32.totalorder %s35, 2
      // Predicated region
      $region81: #{tpu_custom_call.1} parent=5 // pred_check
        %p603 = pneg %p602
      $region82: #{tpu_custom_call.1} parent=5 // pred_check_branch
        %605 = sbr.rel (%p603) target = $region84
      $region83: #{tpu_custom_call.1} parent=5 // pred_region
        // Predicated region
        $region85: #{tpu_custom_call.1} parent=83 // pred_check
          %p606 = pneg %p55
        $region86: #{tpu_custom_call.1} parent=83 // pred_check_branch
          %608 = sbr.rel (%p606) target = $region88
        $region87: #{tpu_custom_call.1} parent=83 // pred_region
          %s609 = smul.u32 2, %s35
          %p610 = scmp.lt.s32.totalorder %s609, 3
          %s611 = scalar_select %p610, %s609, 3
          %s612 = smul.addr %s611, 8
          %s613 = scalar_lea.vmem %s0, %s612
          %s614 = smul.u32 2, %s35
        $region88: #{tpu_custom_call.1} parent=83 // pred_fallthru
          _
        // Predicated region
        $region89: #{tpu_custom_call.1} parent=83 // pred_check
          %p615 = pneg %p81
        $region90: #{tpu_custom_call.1} parent=83 // pred_check_branch
          %617 = sbr.rel (%p615) target = $region92
        $region91: #{tpu_custom_call.1} parent=83 // pred_region
          %s618 = sand.u32 %s71, 1
          %s619 = scalar_lea.sflag [#allocation3], %s618
          %s620 = sand.u32 %s71, 1
          %s621 = smul.addr %s620, 32
          %s622 = scalar_lea.vmem [#allocation2], %s621
          %s623 = smul.u32 2, %s35
          %s625 = ssub.s32 512, 512
          %626 = vsyncadd %s619, %s625
          %s627 = smul.addr %s623, 2
          %s628 = smul.addr %s627, 128
          %s629 = scalar_lea.hbm %s1, %s628
          %s630 = sshll.u32 %s622, 4
          %s631 = int_to_ptr.vmem [resolvable:$true] %s630
          %636 = dma.hbm_to_vmem [thread:$0]  %s629, 512, %s631, %s619, 128, 128, 8
        $region92: #{tpu_custom_call.1} parent=83 // pred_fallthru
          _
      $region84: #{tpu_custom_call.1} parent=5 // pred_fallthru
        _
      %p637 = scmp.le.s32.totalorder 1, %s35
      %p638 = scmp.lt.s32.totalorder %s35, 3
      %p639 = pnand %p637, %p638
      %p640 = pneg %p639
      // Predicated region
      $region93: #{tpu_custom_call.1} parent=5 // pred_check
        _
      $region94: #{tpu_custom_call.1} parent=5 // pred_check_branch
        %642 = sbr.rel (%p639) target = $region96
      $region95: #{tpu_custom_call.1} parent=5 // pred_region
        %s643 = ssub.s32 %s35, 1
        %s644 = sand.u32 %s74, 1
        %s645 = scalar_lea.sflag [#allocation3], %s644
        %s646 = sand.u32 %s74, 1
        %s647 = smul.addr %s646, 32
        %s648 = scalar_lea.vmem [#allocation2], %s647
        // Predicated region
        $region97: #{tpu_custom_call.1} parent=95 // pred_check
          %p649 = pneg %p87
        $region98: #{tpu_custom_call.1} parent=95 // pred_check_branch
          %651 = sbr.rel (%p649) target = $region100
        $region99: #{tpu_custom_call.1} parent=95 // pred_region
          %652 = dma.done %s645, 512
        $region100: #{tpu_custom_call.1} parent=95 // pred_fallthru
          _
        // Predicated region
        $region101: #{tpu_custom_call.1} parent=95 // pred_check
          %p653 = pneg %p108
        $region102: #{tpu_custom_call.1} parent=95 // pred_check_branch
          %655 = sbr.rel (%p653) target = $region104
        $region103: #{tpu_custom_call.1} parent=95 // pred_region
          %656 = dma.done [#allocation6], 64
        $region104: #{tpu_custom_call.1} parent=95 // pred_fallthru
          _
        // Predicated region
        $region105: #{tpu_custom_call.1} parent=95 // pred_check
          %p657 = pneg %p150
        $region106: #{tpu_custom_call.1} parent=95 // pred_check_branch
          %659 = sbr.rel (%p657) target = $region108
        $region107: #{tpu_custom_call.1} parent=95 // pred_region
          %660 = dma.done [#allocation6], 16
        $region108: #{tpu_custom_call.1} parent=95 // pred_fallthru
          _
        // Predicated region
        $region109: #{tpu_custom_call.1} parent=95 // pred_check
          %p661 = pneg %p192
        $region110: #{tpu_custom_call.1} parent=95 // pred_check_branch
          %663 = sbr.rel (%p661) target = $region112
        $region111: #{tpu_custom_call.1} parent=95 // pred_region
          %664 = dma.done [#allocation9], 16
        $region112: #{tpu_custom_call.1} parent=95 // pred_fallthru
          _
        // Predicated region
        $region113: #{tpu_custom_call.1} parent=95 // pred_check
          %p665 = pneg %p213
        $region114: #{tpu_custom_call.1} parent=95 // pred_check_branch
          %667 = sbr.rel (%p665) target = $region116
        $region115: #{tpu_custom_call.1} parent=95 // pred_region
          %668 = dma.done [#allocation9], 256
        $region116: #{tpu_custom_call.1} parent=95 // pred_fallthru
          _
        // Predicated region
        $region117: #{tpu_custom_call.1} parent=95 // pred_check
          %p669 = pneg %p234
        $region118: #{tpu_custom_call.1} parent=95 // pred_check_branch
          %671 = sbr.rel (%p669) target = $region120
        $region119: #{tpu_custom_call.1} parent=95 // pred_region
          %672 = dma.done [#allocation12], 16
        $region120: #{tpu_custom_call.1} parent=95 // pred_fallthru
          _
        // Predicated region
        $region121: #{tpu_custom_call.1} parent=95 // pred_check
          %p673 = pneg %p276
        $region122: #{tpu_custom_call.1} parent=95 // pred_check_branch
          %675 = sbr.rel (%p673) target = $region124
        $region123: #{tpu_custom_call.1} parent=95 // pred_region
          %676 = dma.done [#allocation12], 16
        $region124: #{tpu_custom_call.1} parent=95 // pred_fallthru
          _
        // Predicated region
        $region125: #{tpu_custom_call.1} parent=95 // pred_check
          %p677 = pneg %p297
        $region126: #{tpu_custom_call.1} parent=95 // pred_check_branch
          %679 = sbr.rel (%p677) target = $region128
        $region127: #{tpu_custom_call.1} parent=95 // pred_region
          %680 = dma.done [#allocation15], 16
        $region128: #{tpu_custom_call.1} parent=95 // pred_fallthru
          _
        // Predicated region
        $region129: #{tpu_custom_call.1} parent=95 // pred_check
          %p681 = pneg %p318
        $region130: #{tpu_custom_call.1} parent=95 // pred_check_branch
          %683 = sbr.rel (%p681) target = $region132
        $region131: #{tpu_custom_call.1} parent=95 // pred_region
          %684 = dma.done [#allocation15], 16
        $region132: #{tpu_custom_call.1} parent=95 // pred_fallthru
          _
        %s685 = smul.u32 2, %s40
        %p686 = scmp.lt.s32.totalorder %s685, 3
        %s687 = scalar_select %p686, %s685, 3
        %s688 = smul.addr %s687, 8
        %s689 = scalar_lea.vmem %s0, %s688
        %p690 = pneg %p61
        %p691 = pneg %p58
        %s692 = sand.u32 %s74, 1
        %s693 = scalar_lea.sflag [#allocation3], %s692
        %s694 = sand.u32 %s74, 1
        %s695 = smul.addr %s694, 32
        %s696 = scalar_lea.vmem [#allocation2], %s695
        %p697 = pneg %p87
        %p698 = pneg %p84
        %p699 = pneg %p108
        %p700 = pneg %p105
        %p701 = pneg %p129
        %p702 = pneg %p126
        %p703 = pneg %p150
        %p704 = pneg %p147
        %p705 = pneg %p171
        %p706 = pneg %p168
        %p707 = pneg %p192
        %p708 = pneg %p189
        %p709 = pneg %p213
        %p710 = pneg %p210
        %p711 = pneg %p234
        %p712 = pneg %p231
        %p713 = pneg %p255
        %p714 = pneg %p252
        %p715 = pneg %p276
        %p716 = pneg %p273
        %p717 = pneg %p297
        %p718 = pneg %p294
        %p719 = pneg %p318
        %p720 = pneg %p315
        %p721 = pneg %p339
        %p722 = pneg %p336
        %p723 = pneg %p360
        %p724 = pneg %p357
        %p725 = pneg %p381
        %p726 = pneg %p378
        %p727 = pneg %p402
        %p728 = pneg %p399
        %p729 = pneg %p423
        %p730 = pneg %p420
        %p731 = pneg %p444
        %p732 = pneg %p441
        %p733 = pneg %p470
        %p734 = pneg %p467
        %s735 = sand.u32 %s457, 1
        %s736 = scalar_lea.sflag [#allocation4], %s735
        %s737 = sand.u32 %s457, 1
        %s738 = smul.addr %s737, 16
        %s739 = scalar_lea.vmem [#allocation17], %s738
        %s740 = smul.u32 2, %s40
        %p741 = scmp.lt.s32.totalorder %s740, 3
        %s742 = scalar_select %p741, %s740, 3
        %s743 = smul.addr %s742, 8
        %s744 = scalar_lea.vmem %s0, %s743
        %s745 = smul.u32 2, %s40
        %s746 = smul.u32 2, %s40
        %s747 = smul.u32 2, %s40
        %v749 = vld [vmem:[%s744] sm:$0xff]
        %v750 = vld [vmem:[%s744 + $0x8] sm:$0xff]
        %v751 = vld [vmem:[#allocation5] sm:$0x7]
        %v752 = vlaneseq
        %v753 = vshrl.u32 %v752, 7
        %v754 = vrot.slane %v749, 6
        %v755 = vrot.slane %v750, 6
        %vm756 = vcmp.lt.s32.totalorder %v753, 2
        %v757 = vsel %vm756, %v754, %v755
        %v758 = vsel %vm756, %v755, %v754
        %vm759 = vcmp.ge.s32.totalorder %v753, 2
        %v760 = vsel %vm759, %v758, 0.0
        %v761 = vsel %vm759, %v757, 0.0
        %v762 = vlaneseq
        %v763 = vshrl.u32 %v762, 7
        %v764 = vsub.s32 0, %v763
        %v765 = vrot.slane %v751, %v764
        %v766 = vmul.f32 %v765, %v760
        %v767 = vmul.f32 %v765, %v761
        %v768 = vadd.f32 %v766, 0.0
        %v769 = vadd.f32 %v767, 0.0
        %v770 = vrot.slane %v749, 7
        %v771 = vrot.slane %v750, 7
        %vm772 = vcmp.lt.s32.totalorder %v753, 1
        %v773 = vsel %vm772, %v770, %v771
        %v774 = vsel %vm772, %v771, %v770
        %vm775 = vcmp.ge.s32.totalorder %v753, 1
        %v776 = vsel %vm775, %v774, 0.0
        %v777 = vsel %vm775, %v773, 0.0
        %v778 = vlaneseq
        %v779 = vshrl.u32 %v778, 7
        %v780 = vsub.s32 1, %v779
        %v781 = vrot.slane %v751, %v780
        %v782 = vmul.f32 %v781, %v776
        %v783 = vmul.f32 %v781, %v777
        %v784 = vadd.f32 %v768, %v782
        %v785 = vadd.f32 %v769, %v783
        %v786 = vlaneseq
        %v787 = vshrl.u32 %v786, 7
        %v788 = vsub.s32 2, %v787
        %v789 = vrot.slane %v751, %v788
        %v790 = vmul.f32 %v789, %v749
        %v791 = vmul.f32 %v789, %v750
        %v792 = vadd.f32 %v784, %v790
        %v793 = vadd.f32 %v785, %v791
        %v794 = vadd.f32 %v749, %v792
        %v795 = vadd.f32 %v750, %v793
        %vm796 = vcmask 261120
        %v797 = vsel %vm796, %v794, 0.0
        %798 = vadd.xlane.f32.xlu0 %v797
        %v799 = vpop.xlane.xlu0 %798
        %v800 = vsel %vm796, %v795, 0.0
        %801 = vadd.xlane.f32.xlu0 %v800
        %v802 = vpop.xlane.xlu0 %801
        %v803 = vrcp.pop 32.0
        %v804 = vmul.f32 %v799, %v803
        %v805 = vmul.f32 %v802, %v803
        %v806 = vsub.f32 %v794, %v804
        %v807 = vsub.f32 %v795, %v805
        %v808 = vmul.f32 %v806, %v806
        %v809 = vmul.f32 %v807, %v807
        %v810 = vsel %vm796, %v808, 0.0
        %811 = vadd.xlane.f32.xlu0 %v810
        %v812 = vpop.xlane.xlu0 %811
        %v813 = vsel %vm796, %v809, 0.0
        %814 = vadd.xlane.f32.xlu0 %v813
        %v815 = vpop.xlane.xlu0 %814
        %v816 = vmul.f32 %v812, %v803
        %v817 = vmul.f32 %v815, %v803
        %v818 = vadd.f32 %v816, 1e-05
        %v819 = vadd.f32 %v817, 1e-05
        %v820 = vrsqrt.pop %v818
        %v821 = vrsqrt.pop %v819
        %v822 = vmul.f32 %v806, %v820
        %v823 = vmul.f32 %v807, %v821
        %v824 = vld [vmem:[%s3] sm:$0x1]
        %v826 = vlaneseq
        %v827 = vshrl.u32 %v826, 7
        %v828 = vsub.s32 0, %v827
        %v829 = vrot.slane %v824, %v828
        %v831 = vmul.f32 %v822, %v829
        %v832 = vmul.f32 %v823, %v829
        %v833 = vld [vmem:[#allocation7] sm:$0x1]
        %v835 = vlaneseq
        %v836 = vshrl.u32 %v835, 7
        %v837 = vsub.s32 0, %v836
        %v838 = vrot.slane %v833, %v837
        %v840 = vadd.f32 %v831, %v838
        %v841 = vadd.f32 %v832, %v838
        %v842 = vpack.c.bf16 %v841, %v840
        %v843 = vld [vmem:[%s648] sm:$0xff]
        %v844 = vld [vmem:[%s648 + $0x8] sm:$0xff]
        %v845 = vld [vmem:[%s648 + $0x10] sm:$0xff]
        %v846 = vld [vmem:[%s648 + $0x18] sm:$0xff]
        %v847 = vpack.c.bf16 %v844, %v843
        %v848 = vpack.c.bf16 %v846, %v845
        %v849 = vld [vmem:[%s5] sm:$0xf]
        %v850 = vld [vmem:[%s5 + $0x4] sm:$0xf]
        %v851 = vld [vmem:[%s5 + $0x8] sm:$0xf]
        %v852 = vld [vmem:[%s5 + $0xc] sm:$0xf]
        %v853 = vld [vmem:[#allocation8] sm:$0x1]
        %v855 = vlaneseq
        %v856 = vshrl.u32 %v855, 7
        %v857 = vsub.s32 0, %v856
        %v858 = vrot.slane %v853, %v857
        %v864 = vunpack.c.l.b16 %v849
        %v865 = vunpack.c.l.b16 %v850
        %v866 = vunpack.c.l.b16 %v851
        %v867 = vunpack.c.l.b16 %v852
        %v868 = vpack.c.b16 %v865, %v864
        %v869 = vpack.c.b16 %v867, %v866
        %v873 = vsel %vm796, %v842, 0
        %875 = vmatprep.subr.bf16.mxu0 0
        %876 = vmatpush1.bf16.msra.mxu0 %v868
        %877 = vmatprep.subr.bf16.mxu0 0
        %878 = vmatpush1.bf16.msra.mxu0 %v869
        %879 = vmatprep.subr.bf16.mxu0 0
        %880 = vmatpush1.bf16.msra.mxu0 0
        %881 = vmatprep.subr.bf16.mxu0 0
        %882 = vmatpush1.bf16.msra.mxu0 0
        %883 = vmatprep.subr.bf16.mxu0 0
        %884 = vmatpush1.bf16.msra.mxu0 0
        %885 = vmatprep.subr.bf16.mxu0 0
        %886 = vmatpush1.bf16.msra.mxu0 0
        %887 = vmatprep.subr.bf16.mxu0 0
        %888 = vmatpush1.bf16.msra.mxu0 0
        %889 = vmatprep.subr.bf16.mxu0 0
        %890 = vmatpush1.bf16.msra.mxu0 0
        %891 = vmatprep.subr.bf16.mxu0 0
        %892 = vmatpush1.bf16.msra.mxu0 0
        %893 = vmatprep.subr.bf16.mxu0 0
        %894 = vmatpush1.bf16.msra.mxu0 0
        %895 = vmatprep.subr.bf16.mxu0 0
        %896 = vmatpush1.bf16.msra.mxu0 0
        %897 = vmatprep.subr.bf16.mxu0 0
        %898 = vmatpush1.bf16.msra.mxu0 0
        %899 = vmatprep.subr.bf16.mxu0 0
        %900 = vmatpush1.bf16.msra.mxu0 0
        %901 = vmatprep.subr.bf16.mxu0 0
        %902 = vmatpush1.bf16.msra.mxu0 0
        %903 = vmatprep.subr.bf16.mxu0 0
        %904 = vmatpush1.bf16.msra.mxu0 0
        %905 = vmatprep.subr.bf16.mxu0 0
        %906 = vmatpush1.bf16.msra.mxu0 0
        %907 = vmatprep.mubr.bf16.mxu0 0
        %908 = vmatmul.mubr.bf16.gmra.mrb[0].mxu0 %v873
        %v909 = vpop.f32.mrb[0].mxu0
        %v910 = vadd.f32 %v858, %v909
        %v911 = vpop.f32.mrb[0].mxu0
        %v912 = vpop.f32.mrb[0].mxu0
        %v913 = vadd.f32 %v858, %v912
        %v914 = vpop.f32.mrb[0].mxu0
        %915 = vdwg.mxu0
        %v916 = vld [vmem:[#allocation10] sm:$0xf]
        %v917 = vld [vmem:[#allocation10 + $0x4] sm:$0xf]
        %v918 = vld [vmem:[#allocation10 + $0x8] sm:$0xf]
        %v919 = vld [vmem:[#allocation10 + $0xc] sm:$0xf]
        %v920 = vld [vmem:[#allocation11] sm:$0x1]
        %v922 = vlaneseq
        %v923 = vshrl.u32 %v922, 7
        %v924 = vsub.s32 0, %v923
        %v925 = vrot.slane %v920, %v924
        %v931 = vunpack.c.l.b16 %v916
        %v932 = vunpack.c.l.b16 %v917
        %v933 = vunpack.c.l.b16 %v918
        %v934 = vunpack.c.l.b16 %v919
        %v935 = vpack.c.b16 %v932, %v931
        %v936 = vpack.c.b16 %v934, %v933
        %v940 = vsel %vm796, %v847, 0
        %v943 = vsel %vm796, %v848, 0
        %945 = vmatprep.subr.bf16.mxu0 0
        %946 = vmatpush1.bf16.msra.mxu0 %v935
        %947 = vmatprep.subr.bf16.mxu0 0
        %948 = vmatpush1.bf16.msra.mxu0 %v936
        %949 = vmatprep.subr.bf16.mxu0 0
        %950 = vmatpush1.bf16.msra.mxu0 0
        %951 = vmatprep.subr.bf16.mxu0 0
        %952 = vmatpush1.bf16.msra.mxu0 0
        %953 = vmatprep.subr.bf16.mxu0 0
        %954 = vmatpush1.bf16.msra.mxu0 0
        %955 = vmatprep.subr.bf16.mxu0 0
        %956 = vmatpush1.bf16.msra.mxu0 0
        %957 = vmatprep.subr.bf16.mxu0 0
        %958 = vmatpush1.bf16.msra.mxu0 0
        %959 = vmatprep.subr.bf16.mxu0 0
        %960 = vmatpush1.bf16.msra.mxu0 0
        %961 = vmatprep.subr.bf16.mxu0 0
        %962 = vmatpush1.bf16.msra.mxu0 0
        %963 = vmatprep.subr.bf16.mxu0 0
        %964 = vmatpush1.bf16.msra.mxu0 0
        %965 = vmatprep.subr.bf16.mxu0 0
        %966 = vmatpush1.bf16.msra.mxu0 0
        %967 = vmatprep.subr.bf16.mxu0 0
        %968 = vmatpush1.bf16.msra.mxu0 0
        %969 = vmatprep.subr.bf16.mxu0 0
        %970 = vmatpush1.bf16.msra.mxu0 0
        %971 = vmatprep.subr.bf16.mxu0 0
        %972 = vmatpush1.bf16.msra.mxu0 0
        %973 = vmatprep.subr.bf16.mxu0 0
        %974 = vmatpush1.bf16.msra.mxu0 0
        %975 = vmatprep.subr.bf16.mxu0 0
        %976 = vmatpush1.bf16.msra.mxu0 0
        %977 = vmatprep.mubr.bf16.mxu0 0
        %978 = vmatmul.mubr.bf16.gmra.mrb[0].mxu0 %v940
        %v979 = vpop.f32.mrb[0].mxu0
        %v980 = vadd.f32 %v925, %v979
        %v981 = vpop.f32.mrb[0].mxu0
        %v982 = vpop.f32.mrb[0].mxu0
        %v983 = vadd.f32 %v925, %v982
        %v984 = vpop.f32.mrb[0].mxu0
        %985 = vmatprep.mubr.bf16.mxu0 0
        %986 = vmatmul.mubr.bf16.gmra.mrb[0].mxu0 %v943
        %v987 = vpop.f32.mrb[0].mxu0
        %v988 = vadd.f32 %v925, %v987
        %v989 = vpop.f32.mrb[0].mxu0
        %v990 = vpop.f32.mrb[0].mxu0
        %v991 = vadd.f32 %v925, %v990
        %v992 = vpop.f32.mrb[0].mxu0
        %993 = vdwg.mxu0
        %v994 = vmul.f32 %v910, 0.35355338
        %v995 = vmul.f32 %v913, 0.35355338
        %v996 = vpack.c.bf16 %v995, %v994
        %v998 = vunpack.c.l.b16 %v996
        %v999 = vunpack.c.h.b16 %v996
        %v1000 = vpack.c.b16 %v998, %v998
        %v1001 = vpack.c.b16 %v999, %v999
        %v1002 = vpack.c.bf16 %v983, %v980
        %v1003 = vpack.c.bf16 %v991, %v988
        %vm1004 = vcmask 64512
        %v1006 = vsel %vm1004, %v1000, 0
        %v1009 = vsel %vm1004, %v1002, 0
        %1011 = vmatprep.subr.bf16.mxu0 0
        %1012 = vmatpush1.bf16.xpose.msra.mxu0 %v1009
        %1013 = vmatprep.subr.bf16.mxu0 0
        %1014 = vmatpush1.bf16.xpose.msra.mxu0 0
        %1015 = vmatprep.subr.bf16.mxu0 0
        %1016 = vmatpush1.bf16.xpose.msra.mxu0 0
        %1017 = vmatprep.subr.bf16.mxu0 0
        %1018 = vmatpush1.bf16.xpose.msra.mxu0 0
        %1019 = vmatprep.subr.bf16.mxu0 0
        %1020 = vmatpush1.bf16.xpose.msra.mxu0 0
        %1021 = vmatprep.subr.bf16.mxu0 0
        %1022 = vmatpush1.bf16.xpose.msra.mxu0 0
        %1023 = vmatprep.subr.bf16.mxu0 0
        %1024 = vmatpush1.bf16.xpose.msra.mxu0 0
        %1025 = vmatprep.subr.bf16.mxu0 0
        %1026 = vmatpush1.bf16.xpose.msra.mxu0 0
        %1027 = vmatprep.subr.bf16.mxu0 0
        %1028 = vmatpush1.bf16.xpose.msra.mxu0 0
        %1029 = vmatprep.subr.bf16.mxu0 0
        %1030 = vmatpush1.bf16.xpose.msra.mxu0 0
        %1031 = vmatprep.subr.bf16.mxu0 0
        %1032 = vmatpush1.bf16.xpose.msra.mxu0 0
        %1033 = vmatprep.subr.bf16.mxu0 0
        %1034 = vmatpush1.bf16.xpose.msra.mxu0 0
        %1035 = vmatprep.subr.bf16.mxu0 0
        %1036 = vmatpush1.bf16.xpose.msra.mxu0 0
        %1037 = vmatprep.subr.bf16.mxu0 0
        %1038 = vmatpush1.bf16.xpose.msra.mxu0 0
        %1039 = vmatprep.subr.bf16.mxu0 0
        %1040 = vmatpush1.bf16.xpose.msra.mxu0 0
        %1041 = vmatprep.subr.bf16.mxu0 0
        %1042 = vmatpush1.bf16.xpose.msra.mxu0 0
        %1043 = vmatprep.mubr.bf16.mxu0 0
        %1044 = vmatmul.mubr.bf16.gmra.mrb[0].mxu0 %v1006
        %v1045 = vpop.f32.mrb[0].mxu0
        %v1046 = vadd.f32 0.0, %v1045
        %v1047 = vpop.f32.mrb[0].mxu0
        %v1048 = vpop.f32.mrb[0].mxu0
        %v1049 = vpop.f32.mrb[0].mxu0
        %1050 = vdwg.mxu0
        %v1052 = vsel %vm1004, %v1001, 0
        %v1055 = vsel %vm1004, %v1003, 0
        %1057 = vmatprep.subr.bf16.mxu0 0
        %1058 = vmatpush1.bf16.xpose.msra.mxu0 %v1055
        %1059 = vmatprep.subr.bf16.mxu0 0
        %1060 = vmatpush1.bf16.xpose.msra.mxu0 0
        %1061 = vmatprep.subr.bf16.mxu0 0
        %1062 = vmatpush1.bf16.xpose.msra.mxu0 0
        %1063 = vmatprep.subr.bf16.mxu0 0
        %1064 = vmatpush1.bf16.xpose.msra.mxu0 0
        %1065 = vmatprep.subr.bf16.mxu0 0
        %1066 = vmatpush1.bf16.xpose.msra.mxu0 0
        %1067 = vmatprep.subr.bf16.mxu0 0
        %1068 = vmatpush1.bf16.xpose.msra.mxu0 0
        %1069 = vmatprep.subr.bf16.mxu0 0
        %1070 = vmatpush1.bf16.xpose.msra.mxu0 0
        %1071 = vmatprep.subr.bf16.mxu0 0
        %1072 = vmatpush1.bf16.xpose.msra.mxu0 0
        %1073 = vmatprep.subr.bf16.mxu0 0
        %1074 = vmatpush1.bf16.xpose.msra.mxu0 0
        %1075 = vmatprep.subr.bf16.mxu0 0
        %1076 = vmatpush1.bf16.xpose.msra.mxu0 0
        %1077 = vmatprep.subr.bf16.mxu0 0
        %1078 = vmatpush1.bf16.xpose.msra.mxu0 0
        %1079 = vmatprep.subr.bf16.mxu0 0
        %1080 = vmatpush1.bf16.xpose.msra.mxu0 0
        %1081 = vmatprep.subr.bf16.mxu0 0
        %1082 = vmatpush1.bf16.xpose.msra.mxu0 0
        %1083 = vmatprep.subr.bf16.mxu0 0
        %1084 = vmatpush1.bf16.xpose.msra.mxu0 0
        %1085 = vmatprep.subr.bf16.mxu0 0
        %1086 = vmatpush1.bf16.xpose.msra.mxu0 0
        %1087 = vmatprep.subr.bf16.mxu0 0
        %1088 = vmatpush1.bf16.xpose.msra.mxu0 0
        %1089 = vmatprep.mubr.bf16.mxu0 0
        %1090 = vmatmul.mubr.bf16.gmra.mrb[0].mxu0 %v1052
        %v1091 = vpop.f32.mrb[0].mxu0
        %v1092 = vadd.f32 0.0, %v1091
        %v1093 = vpop.f32.mrb[0].mxu0
        %v1094 = vpop.f32.mrb[0].mxu0
        %v1095 = vpop.f32.mrb[0].mxu0
        %1096 = vdwg.mxu0
        %vm1097 = vcmask 130048
        %v1098 = vsel %vm1097, %v1046, -inf
        %1099 = vmax.xlane.f32.xlu0 %v1098
        %v1100 = vpop.xlane.xlu0 %1099
        %v1101 = vsel %vm1097, %v1092, -inf
        %1102 = vmax.xlane.f32.xlu0 %v1101
        %v1103 = vpop.xlane.xlu0 %1102
        %v1104 = vsub.f32 %v1046, %v1100
        %v1105 = vsub.f32 %v1092, %v1103
        %v1106 = vmul.f32 %v1104, 1.442695
        %v1107 = vpow.pop %v1106
        %v1108 = vmul.f32 %v1105, 1.442695
        %v1109 = vpow.pop %v1108
        %v1110 = vsel %vm1097, %v1107, 0.0
        %1111 = vadd.xlane.f32.xlu0 %v1110
        %v1112 = vpop.xlane.xlu0 %1111
        %v1113 = vsel %vm1097, %v1109, 0.0
        %1114 = vadd.xlane.f32.xlu0 %v1113
        %v1115 = vpop.xlane.xlu0 %1114
        %v1116 = vrcp.pop %v1112
        %v1117 = vrcp.pop %v1115
        %v1118 = vmul.f32 %v1107, %v1116
        %v1119 = vmul.f32 %v1109, %v1117
        %v1120 = vpack.c.bf16 %v1118, %v1118
        %v1121 = vpack.c.bf16 %v1119, %v1119
        %1123 = vrot.lane.b32.xlu0 %v1002, 96
        %v1124 = vpop.permute.xlu0 %1123
        %v1127 = vsel %vm1097, %v1120, 0
        %1129 = vmatprep.subr.bf16.mxu0 0
        %1130 = vmatpush1.bf16.msra.mxu0 %v1124
        %1131 = vmatprep.subr.bf16.mxu0 0
        %1132 = vmatpush1.bf16.msra.mxu0 0
        %1133 = vmatprep.subr.bf16.mxu0 0
        %1134 = vmatpush1.bf16.msra.mxu0 0
        %1135 = vmatprep.subr.bf16.mxu0 0
        %1136 = vmatpush1.bf16.msra.mxu0 0
        %1137 = vmatprep.subr.bf16.mxu0 0
        %1138 = vmatpush1.bf16.msra.mxu0 0
        %1139 = vmatprep.subr.bf16.mxu0 0
        %1140 = vmatpush1.bf16.msra.mxu0 0
        %1141 = vmatprep.subr.bf16.mxu0 0
        %1142 = vmatpush1.bf16.msra.mxu0 0
        %1143 = vmatprep.subr.bf16.mxu0 0
        %1144 = vmatpush1.bf16.msra.mxu0 0
        %1145 = vmatprep.subr.bf16.mxu0 0
        %1146 = vmatpush1.bf16.msra.mxu0 0
        %1147 = vmatprep.subr.bf16.mxu0 0
        %1148 = vmatpush1.bf16.msra.mxu0 0
        %1149 = vmatprep.subr.bf16.mxu0 0
        %1150 = vmatpush1.bf16.msra.mxu0 0
        %1151 = vmatprep.subr.bf16.mxu0 0
        %1152 = vmatpush1.bf16.msra.mxu0 0
        %1153 = vmatprep.subr.bf16.mxu0 0
        %1154 = vmatpush1.bf16.msra.mxu0 0
        %1155 = vmatprep.subr.bf16.mxu0 0
        %1156 = vmatpush1.bf16.msra.mxu0 0
        %1157 = vmatprep.subr.bf16.mxu0 0
        %1158 = vmatpush1.bf16.msra.mxu0 0
        %1159 = vmatprep.subr.bf16.mxu0 0
        %1160 = vmatpush1.bf16.msra.mxu0 0
        %1161 = vmatprep.mubr.bf16.mxu0 0
        %1162 = vmatmul.mubr.bf16.gmra.mrb[0].mxu0 %v1127
        %v1163 = vpop.f32.mrb[0].mxu0
        %v1164 = vadd.f32 0.0, %v1163
        %v1165 = vpop.f32.mrb[0].mxu0
        %v1166 = vpop.f32.mrb[0].mxu0
        %v1167 = vpop.f32.mrb[0].mxu0
        %1168 = vdwg.mxu0
        %1170 = vrot.lane.b32.xlu0 %v1003, 96
        %v1171 = vpop.permute.xlu0 %1170
        %v1174 = vsel %vm1097, %v1121, 0
        %1176 = vmatprep.subr.bf16.mxu0 0
        %1177 = vmatpush1.bf16.msra.mxu0 %v1171
        %1178 = vmatprep.subr.bf16.mxu0 0
        %1179 = vmatpush1.bf16.msra.mxu0 0
        %1180 = vmatprep.subr.bf16.mxu0 0
        %1181 = vmatpush1.bf16.msra.mxu0 0
        %1182 = vmatprep.subr.bf16.mxu0 0
        %1183 = vmatpush1.bf16.msra.mxu0 0
        %1184 = vmatprep.subr.bf16.mxu0 0
        %1185 = vmatpush1.bf16.msra.mxu0 0
        %1186 = vmatprep.subr.bf16.mxu0 0
        %1187 = vmatpush1.bf16.msra.mxu0 0
        %1188 = vmatprep.subr.bf16.mxu0 0
        %1189 = vmatpush1.bf16.msra.mxu0 0
        %1190 = vmatprep.subr.bf16.mxu0 0
        %1191 = vmatpush1.bf16.msra.mxu0 0
        %1192 = vmatprep.subr.bf16.mxu0 0
        %1193 = vmatpush1.bf16.msra.mxu0 0
        %1194 = vmatprep.subr.bf16.mxu0 0
        %1195 = vmatpush1.bf16.msra.mxu0 0
        %1196 = vmatprep.subr.bf16.mxu0 0
        %1197 = vmatpush1.bf16.msra.mxu0 0
        %1198 = vmatprep.subr.bf16.mxu0 0
        %1199 = vmatpush1.bf16.msra.mxu0 0
        %1200 = vmatprep.subr.bf16.mxu0 0
        %1201 = vmatpush1.bf16.msra.mxu0 0
        %1202 = vmatprep.subr.bf16.mxu0 0
        %1203 = vmatpush1.bf16.msra.mxu0 0
        %1204 = vmatprep.subr.bf16.mxu0 0
        %1205 = vmatpush1.bf16.msra.mxu0 0
        %1206 = vmatprep.subr.bf16.mxu0 0
        %1207 = vmatpush1.bf16.msra.mxu0 0
        %1208 = vmatprep.mubr.bf16.mxu0 0
        %1209 = vmatmul.mubr.bf16.gmra.mrb[0].mxu0 %v1174
        %v1210 = vpop.f32.mrb[0].mxu0
        %v1211 = vadd.f32 0.0, %v1210
        %v1212 = vpop.f32.mrb[0].mxu0
        %v1213 = vpop.f32.mrb[0].mxu0
        %v1214 = vpop.f32.mrb[0].mxu0
        %1215 = vdwg.mxu0
        %1216 = vrot.lane.b32.xlu0 %v1000, 120
        %v1217 = vpop.permute.xlu0 %1216
        %1218 = vrot.lane.b32.xlu0 %v1002, 120
        %v1219 = vpop.permute.xlu0 %1218
        %v1221 = vsel %vm1004, %v1217, 0
        %v1224 = vsel %vm1004, %v1219, 0
        %1226 = vmatprep.subr.bf16.mxu0 0
        %1227 = vmatpush1.bf16.xpose.msra.mxu0 %v1224
        %1228 = vmatprep.subr.bf16.mxu0 0
        %1229 = vmatpush1.bf16.xpose.msra.mxu0 0
        %1230 = vmatprep.subr.bf16.mxu0 0
        %1231 = vmatpush1.bf16.xpose.msra.mxu0 0
        %1232 = vmatprep.subr.bf16.mxu0 0
        %1233 = vmatpush1.bf16.xpose.msra.mxu0 0
        %1234 = vmatprep.subr.bf16.mxu0 0
        %1235 = vmatpush1.bf16.xpose.msra.mxu0 0
        %1236 = vmatprep.subr.bf16.mxu0 0
        %1237 = vmatpush1.bf16.xpose.msra.mxu0 0
        %1238 = vmatprep.subr.bf16.mxu0 0
        %1239 = vmatpush1.bf16.xpose.msra.mxu0 0
        %1240 = vmatprep.subr.bf16.mxu0 0
        %1241 = vmatpush1.bf16.xpose.msra.mxu0 0
        %1242 = vmatprep.subr.bf16.mxu0 0
        %1243 = vmatpush1.bf16.xpose.msra.mxu0 0
        %1244 = vmatprep.subr.bf16.mxu0 0
        %1245 = vmatpush1.bf16.xpose.msra.mxu0 0
        %1246 = vmatprep.subr.bf16.mxu0 0
        %1247 = vmatpush1.bf16.xpose.msra.mxu0 0
        %1248 = vmatprep.subr.bf16.mxu0 0
        %1249 = vmatpush1.bf16.xpose.msra.mxu0 0
        %1250 = vmatprep.subr.bf16.mxu0 0
        %1251 = vmatpush1.bf16.xpose.msra.mxu0 0
        %1252 = vmatprep.subr.bf16.mxu0 0
        %1253 = vmatpush1.bf16.xpose.msra.mxu0 0
        %1254 = vmatprep.subr.bf16.mxu0 0
        %1255 = vmatpush1.bf16.xpose.msra.mxu0 0
        %1256 = vmatprep.subr.bf16.mxu0 0
        %1257 = vmatpush1.bf16.xpose.msra.mxu0 0
        %1258 = vmatprep.mubr.bf16.mxu0 0
        %1259 = vmatmul.mubr.bf16.gmra.mrb[0].mxu0 %v1221
        %v1260 = vpop.f32.mrb[0].mxu0
        %v1261 = vadd.f32 0.0, %v1260
        %v1262 = vpop.f32.mrb[0].mxu0
        %v1263 = vpop.f32.mrb[0].mxu0
        %v1264 = vpop.f32.mrb[0].mxu0
        %1265 = vdwg.mxu0
        %1266 = vrot.lane.b32.xlu0 %v1001, 120
        %v1267 = vpop.permute.xlu0 %1266
        %1268 = vrot.lane.b32.xlu0 %v1003, 120
        %v1269 = vpop.permute.xlu0 %1268
        %v1271 = vsel %vm1004, %v1267, 0
        %v1274 = vsel %vm1004, %v1269, 0
        %1276 = vmatprep.subr.bf16.mxu0 0
        %1277 = vmatpush1.bf16.xpose.msra.mxu0 %v1274
        %1278 = vmatprep.subr.bf16.mxu0 0
        %1279 = vmatpush1.bf16.xpose.msra.mxu0 0
        %1280 = vmatprep.subr.bf16.mxu0 0
        %1281 = vmatpush1.bf16.xpose.msra.mxu0 0
        %1282 = vmatprep.subr.bf16.mxu0 0
        %1283 = vmatpush1.bf16.xpose.msra.mxu0 0
        %1284 = vmatprep.subr.bf16.mxu0 0
        %1285 = vmatpush1.bf16.xpose.msra.mxu0 0
        %1286 = vmatprep.subr.bf16.mxu0 0
        %1287 = vmatpush1.bf16.xpose.msra.mxu0 0
        %1288 = vmatprep.subr.bf16.mxu0 0
        %1289 = vmatpush1.bf16.xpose.msra.mxu0 0
        %1290 = vmatprep.subr.bf16.mxu0 0
        %1291 = vmatpush1.bf16.xpose.msra.mxu0 0
        %1292 = vmatprep.subr.bf16.mxu0 0
        %1293 = vmatpush1.bf16.xpose.msra.mxu0 0
        %1294 = vmatprep.subr.bf16.mxu0 0
        %1295 = vmatpush1.bf16.xpose.msra.mxu0 0
        %1296 = vmatprep.subr.bf16.mxu0 0
        %1297 = vmatpush1.bf16.xpose.msra.mxu0 0
        %1298 = vmatprep.subr.bf16.mxu0 0
        %1299 = vmatpush1.bf16.xpose.msra.mxu0 0
        %1300 = vmatprep.subr.bf16.mxu0 0
        %1301 = vmatpush1.bf16.xpose.msra.mxu0 0
        %1302 = vmatprep.subr.bf16.mxu0 0
        %1303 = vmatpush1.bf16.xpose.msra.mxu0 0
        %1304 = vmatprep.subr.bf16.mxu0 0
        %1305 = vmatpush1.bf16.xpose.msra.mxu0 0
        %1306 = vmatprep.subr.bf16.mxu0 0
        %1307 = vmatpush1.bf16.xpose.msra.mxu0 0
        %1308 = vmatprep.mubr.bf16.mxu0 0
        %1309 = vmatmul.mubr.bf16.gmra.mrb[0].mxu0 %v1271
        %v1310 = vpop.f32.mrb[0].mxu0
        %v1311 = vadd.f32 0.0, %v1310
        %v1312 = vpop.f32.mrb[0].mxu0
        %v1313 = vpop.f32.mrb[0].mxu0
        %v1314 = vpop.f32.mrb[0].mxu0
        %1315 = vdwg.mxu0
        %v1316 = vsel %vm1097, %v1261, -inf
        %1317 = vmax.xlane.f32.xlu0 %v1316
        %v1318 = vpop.xlane.xlu0 %1317
        %v1319 = vsel %vm1097, %v1311, -inf
        %1320 = vmax.xlane.f32.xlu0 %v1319
        %v1321 = vpop.xlane.xlu0 %1320
        %v1322 = vsub.f32 %v1261, %v1318
        %v1323 = vsub.f32 %v1311, %v1321
        %v1324 = vmul.f32 %v1322, 1.442695
        %v1325 = vpow.pop %v1324
        %v1326 = vmul.f32 %v1323, 1.442695
        %v1327 = vpow.pop %v1326
        %v1328 = vsel %vm1097, %v1325, 0.0
        %1329 = vadd.xlane.f32.xlu0 %v1328
        %v1330 = vpop.xlane.xlu0 %1329
        %v1331 = vsel %vm1097, %v1327, 0.0
        %1332 = vadd.xlane.f32.xlu0 %v1331
        %v1333 = vpop.xlane.xlu0 %1332
        %v1334 = vrcp.pop %v1330
        %v1335 = vrcp.pop %v1333
        %v1336 = vmul.f32 %v1325, %v1334
        %v1337 = vmul.f32 %v1327, %v1335
        %v1338 = vpack.c.bf16 %v1336, %v1336
        %v1339 = vpack.c.bf16 %v1337, %v1337
        %1340 = vrot.lane.b32.xlu0 %v1002, 88
        %v1341 = vpop.permute.xlu0 %1340
        %v1344 = vsel %vm1097, %v1338, 0
        %1346 = vmatprep.subr.bf16.mxu0 0
        %1347 = vmatpush1.bf16.msra.mxu0 %v1341
        %1348 = vmatprep.subr.bf16.mxu0 0
        %1349 = vmatpush1.bf16.msra.mxu0 0
        %1350 = vmatprep.subr.bf16.mxu0 0
        %1351 = vmatpush1.bf16.msra.mxu0 0
        %1352 = vmatprep.subr.bf16.mxu0 0
        %1353 = vmatpush1.bf16.msra.mxu0 0
        %1354 = vmatprep.subr.bf16.mxu0 0
        %1355 = vmatpush1.bf16.msra.mxu0 0
        %1356 = vmatprep.subr.bf16.mxu0 0
        %1357 = vmatpush1.bf16.msra.mxu0 0
        %1358 = vmatprep.subr.bf16.mxu0 0
        %1359 = vmatpush1.bf16.msra.mxu0 0
        %1360 = vmatprep.subr.bf16.mxu0 0
        %1361 = vmatpush1.bf16.msra.mxu0 0
        %1362 = vmatprep.subr.bf16.mxu0 0
        %1363 = vmatpush1.bf16.msra.mxu0 0
        %1364 = vmatprep.subr.bf16.mxu0 0
        %1365 = vmatpush1.bf16.msra.mxu0 0
        %1366 = vmatprep.subr.bf16.mxu0 0
        %1367 = vmatpush1.bf16.msra.mxu0 0
        %1368 = vmatprep.subr.bf16.mxu0 0
        %1369 = vmatpush1.bf16.msra.mxu0 0
        %1370 = vmatprep.subr.bf16.mxu0 0
        %1371 = vmatpush1.bf16.msra.mxu0 0
        %1372 = vmatprep.subr.bf16.mxu0 0
        %1373 = vmatpush1.bf16.msra.mxu0 0
        %1374 = vmatprep.subr.bf16.mxu0 0
        %1375 = vmatpush1.bf16.msra.mxu0 0
        %1376 = vmatprep.subr.bf16.mxu0 0
        %1377 = vmatpush1.bf16.msra.mxu0 0
        %1378 = vmatprep.mubr.bf16.mxu0 0
        %1379 = vmatmul.mubr.bf16.gmra.mrb[0].mxu0 %v1344
        %v1380 = vpop.f32.mrb[0].mxu0
        %v1381 = vadd.f32 0.0, %v1380
        %v1382 = vpop.f32.mrb[0].mxu0
        %v1383 = vpop.f32.mrb[0].mxu0
        %v1384 = vpop.f32.mrb[0].mxu0
        %1385 = vdwg.mxu0
        %1386 = vrot.lane.b32.xlu0 %v1003, 88
        %v1387 = vpop.permute.xlu0 %1386
        %v1390 = vsel %vm1097, %v1339, 0
        %1392 = vmatprep.subr.bf16.mxu0 0
        %1393 = vmatpush1.bf16.msra.mxu0 %v1387
        %1394 = vmatprep.subr.bf16.mxu0 0
        %1395 = vmatpush1.bf16.msra.mxu0 0
        %1396 = vmatprep.subr.bf16.mxu0 0
        %1397 = vmatpush1.bf16.msra.mxu0 0
        %1398 = vmatprep.subr.bf16.mxu0 0
        %1399 = vmatpush1.bf16.msra.mxu0 0
        %1400 = vmatprep.subr.bf16.mxu0 0
        %1401 = vmatpush1.bf16.msra.mxu0 0
        %1402 = vmatprep.subr.bf16.mxu0 0
        %1403 = vmatpush1.bf16.msra.mxu0 0
        %1404 = vmatprep.subr.bf16.mxu0 0
        %1405 = vmatpush1.bf16.msra.mxu0 0
        %1406 = vmatprep.subr.bf16.mxu0 0
        %1407 = vmatpush1.bf16.msra.mxu0 0
        %1408 = vmatprep.subr.bf16.mxu0 0
        %1409 = vmatpush1.bf16.msra.mxu0 0
        %1410 = vmatprep.subr.bf16.mxu0 0
        %1411 = vmatpush1.bf16.msra.mxu0 0
        %1412 = vmatprep.subr.bf16.mxu0 0
        %1413 = vmatpush1.bf16.msra.mxu0 0
        %1414 = vmatprep.subr.bf16.mxu0 0
        %1415 = vmatpush1.bf16.msra.mxu0 0
        %1416 = vmatprep.subr.bf16.mxu0 0
        %1417 = vmatpush1.bf16.msra.mxu0 0
        %1418 = vmatprep.subr.bf16.mxu0 0
        %1419 = vmatpush1.bf16.msra.mxu0 0
        %1420 = vmatprep.subr.bf16.mxu0 0
        %1421 = vmatpush1.bf16.msra.mxu0 0
        %1422 = vmatprep.subr.bf16.mxu0 0
        %1423 = vmatpush1.bf16.msra.mxu0 0
        %1424 = vmatprep.mubr.bf16.mxu0 0
        %1425 = vmatmul.mubr.bf16.gmra.mrb[0].mxu0 %v1390
        %v1426 = vpop.f32.mrb[0].mxu0
        %v1427 = vadd.f32 0.0, %v1426
        %v1428 = vpop.f32.mrb[0].mxu0
        %v1429 = vpop.f32.mrb[0].mxu0
        %v1430 = vpop.f32.mrb[0].mxu0
        %1431 = vdwg.mxu0
        %1432 = vrot.lane.b32.xlu0 %v1000, 112
        %v1433 = vpop.permute.xlu0 %1432
        %1434 = vrot.lane.b32.xlu0 %v1002, 112
        %v1435 = vpop.permute.xlu0 %1434
        %v1437 = vsel %vm1004, %v1433, 0
        %v1440 = vsel %vm1004, %v1435, 0
        %1442 = vmatprep.subr.bf16.mxu0 0
        %1443 = vmatpush1.bf16.xpose.msra.mxu0 %v1440
        %1444 = vmatprep.subr.bf16.mxu0 0
        %1445 = vmatpush1.bf16.xpose.msra.mxu0 0
        %1446 = vmatprep.subr.bf16.mxu0 0
        %1447 = vmatpush1.bf16.xpose.msra.mxu0 0
        %1448 = vmatprep.subr.bf16.mxu0 0
        %1449 = vmatpush1.bf16.xpose.msra.mxu0 0
        %1450 = vmatprep.subr.bf16.mxu0 0
        %1451 = vmatpush1.bf16.xpose.msra.mxu0 0
        %1452 = vmatprep.subr.bf16.mxu0 0
        %1453 = vmatpush1.bf16.xpose.msra.mxu0 0
        %1454 = vmatprep.subr.bf16.mxu0 0
        %1455 = vmatpush1.bf16.xpose.msra.mxu0 0
        %1456 = vmatprep.subr.bf16.mxu0 0
        %1457 = vmatpush1.bf16.xpose.msra.mxu0 0
        %1458 = vmatprep.subr.bf16.mxu0 0
        %1459 = vmatpush1.bf16.xpose.msra.mxu0 0
        %1460 = vmatprep.subr.bf16.mxu0 0
        %1461 = vmatpush1.bf16.xpose.msra.mxu0 0
        %1462 = vmatprep.subr.bf16.mxu0 0
        %1463 = vmatpush1.bf16.xpose.msra.mxu0 0
        %1464 = vmatprep.subr.bf16.mxu0 0
        %1465 = vmatpush1.bf16.xpose.msra.mxu0 0
        %1466 = vmatprep.subr.bf16.mxu0 0
        %1467 = vmatpush1.bf16.xpose.msra.mxu0 0
        %1468 = vmatprep.subr.bf16.mxu0 0
        %1469 = vmatpush1.bf16.xpose.msra.mxu0 0
        %1470 = vmatprep.subr.bf16.mxu0 0
        %1471 = vmatpush1.bf16.xpose.msra.mxu0 0
        %1472 = vmatprep.subr.bf16.mxu0 0
        %1473 = vmatpush1.bf16.xpose.msra.mxu0 0
        %1474 = vmatprep.mubr.bf16.mxu0 0
        %1475 = vmatmul.mubr.bf16.gmra.mrb[0].mxu0 %v1437
        %v1476 = vpop.f32.mrb[0].mxu0
        %v1477 = vadd.f32 0.0, %v1476
        %v1478 = vpop.f32.mrb[0].mxu0
        %v1479 = vpop.f32.mrb[0].mxu0
        %v1480 = vpop.f32.mrb[0].mxu0
        %1481 = vdwg.mxu0
        %1482 = vrot.lane.b32.xlu0 %v1001, 112
        %v1483 = vpop.permute.xlu0 %1482
        %1484 = vrot.lane.b32.xlu0 %v1003, 112
        %v1485 = vpop.permute.xlu0 %1484
        %v1487 = vsel %vm1004, %v1483, 0
        %v1490 = vsel %vm1004, %v1485, 0
        %1492 = vmatprep.subr.bf16.mxu0 0
        %1493 = vmatpush1.bf16.xpose.msra.mxu0 %v1490
        %1494 = vmatprep.subr.bf16.mxu0 0
        %1495 = vmatpush1.bf16.xpose.msra.mxu0 0
        %1496 = vmatprep.subr.bf16.mxu0 0
        %1497 = vmatpush1.bf16.xpose.msra.mxu0 0
        %1498 = vmatprep.subr.bf16.mxu0 0
        %1499 = vmatpush1.bf16.xpose.msra.mxu0 0
        %1500 = vmatprep.subr.bf16.mxu0 0
        %1501 = vmatpush1.bf16.xpose.msra.mxu0 0
        %1502 = vmatprep.subr.bf16.mxu0 0
        %1503 = vmatpush1.bf16.xpose.msra.mxu0 0
        %1504 = vmatprep.subr.bf16.mxu0 0
        %1505 = vmatpush1.bf16.xpose.msra.mxu0 0
        %1506 = vmatprep.subr.bf16.mxu0 0
        %1507 = vmatpush1.bf16.xpose.msra.mxu0 0
        %1508 = vmatprep.subr.bf16.mxu0 0
        %1509 = vmatpush1.bf16.xpose.msra.mxu0 0
        %1510 = vmatprep.subr.bf16.mxu0 0
        %1511 = vmatpush1.bf16.xpose.msra.mxu0 0
        %1512 = vmatprep.subr.bf16.mxu0 0
        %1513 = vmatpush1.bf16.xpose.msra.mxu0 0
        %1514 = vmatprep.subr.bf16.mxu0 0
        %1515 = vmatpush1.bf16.xpose.msra.mxu0 0
        %1516 = vmatprep.subr.bf16.mxu0 0
        %1517 = vmatpush1.bf16.xpose.msra.mxu0 0
        %1518 = vmatprep.subr.bf16.mxu0 0
        %1519 = vmatpush1.bf16.xpose.msra.mxu0 0
        %1520 = vmatprep.subr.bf16.mxu0 0
        %1521 = vmatpush1.bf16.xpose.msra.mxu0 0
        %1522 = vmatprep.subr.bf16.mxu0 0
        %1523 = vmatpush1.bf16.xpose.msra.mxu0 0
        %1524 = vmatprep.mubr.bf16.mxu0 0
        %1525 = vmatmul.mubr.bf16.gmra.mrb[0].mxu0 %v1487
        %v1526 = vpop.f32.mrb[0].mxu0
        %v1527 = vadd.f32 0.0, %v1526
        %v1528 = vpop.f32.mrb[0].mxu0
        %v1529 = vpop.f32.mrb[0].mxu0
        %v1530 = vpop.f32.mrb[0].mxu0
        %1531 = vdwg.mxu0
        %v1532 = vsel %vm1097, %v1477, -inf
        %1533 = vmax.xlane.f32.xlu0 %v1532
        %v1534 = vpop.xlane.xlu0 %1533
        %v1535 = vsel %vm1097, %v1527, -inf
        %1536 = vmax.xlane.f32.xlu0 %v1535
        %v1537 = vpop.xlane.xlu0 %1536
        %v1538 = vsub.f32 %v1477, %v1534
        %v1539 = vsub.f32 %v1527, %v1537
        %v1540 = vmul.f32 %v1538, 1.442695
        %v1541 = vpow.pop %v1540
        %v1542 = vmul.f32 %v1539, 1.442695
        %v1543 = vpow.pop %v1542
        %v1544 = vsel %vm1097, %v1541, 0.0
        %1545 = vadd.xlane.f32.xlu0 %v1544
        %v1546 = vpop.xlane.xlu0 %1545
        %v1547 = vsel %vm1097, %v1543, 0.0
        %1548 = vadd.xlane.f32.xlu0 %v1547
        %v1549 = vpop.xlane.xlu0 %1548
        %v1550 = vrcp.pop %v1546
        %v1551 = vrcp.pop %v1549
        %v1552 = vmul.f32 %v1541, %v1550
        %v1553 = vmul.f32 %v1543, %v1551
        %v1554 = vpack.c.bf16 %v1552, %v1552
        %v1555 = vpack.c.bf16 %v1553, %v1553
        %1556 = vrot.lane.b32.xlu0 %v1002, 80
        %v1557 = vpop.permute.xlu0 %1556
        %v1560 = vsel %vm1097, %v1554, 0
        %1562 = vmatprep.subr.bf16.mxu0 0
        %1563 = vmatpush1.bf16.msra.mxu0 %v1557
        %1564 = vmatprep.subr.bf16.mxu0 0
        %1565 = vmatpush1.bf16.msra.mxu0 0
        %1566 = vmatprep.subr.bf16.mxu0 0
        %1567 = vmatpush1.bf16.msra.mxu0 0
        %1568 = vmatprep.subr.bf16.mxu0 0
        %1569 = vmatpush1.bf16.msra.mxu0 0
        %1570 = vmatprep.subr.bf16.mxu0 0
        %1571 = vmatpush1.bf16.msra.mxu0 0
        %1572 = vmatprep.subr.bf16.mxu0 0
        %1573 = vmatpush1.bf16.msra.mxu0 0
        %1574 = vmatprep.subr.bf16.mxu0 0
        %1575 = vmatpush1.bf16.msra.mxu0 0
        %1576 = vmatprep.subr.bf16.mxu0 0
        %1577 = vmatpush1.bf16.msra.mxu0 0
        %1578 = vmatprep.subr.bf16.mxu0 0
        %1579 = vmatpush1.bf16.msra.mxu0 0
        %1580 = vmatprep.subr.bf16.mxu0 0
        %1581 = vmatpush1.bf16.msra.mxu0 0
        %1582 = vmatprep.subr.bf16.mxu0 0
        %1583 = vmatpush1.bf16.msra.mxu0 0
        %1584 = vmatprep.subr.bf16.mxu0 0
        %1585 = vmatpush1.bf16.msra.mxu0 0
        %1586 = vmatprep.subr.bf16.mxu0 0
        %1587 = vmatpush1.bf16.msra.mxu0 0
        %1588 = vmatprep.subr.bf16.mxu0 0
        %1589 = vmatpush1.bf16.msra.mxu0 0
        %1590 = vmatprep.subr.bf16.mxu0 0
        %1591 = vmatpush1.bf16.msra.mxu0 0
        %1592 = vmatprep.subr.bf16.mxu0 0
        %1593 = vmatpush1.bf16.msra.mxu0 0
        %1594 = vmatprep.mubr.bf16.mxu0 0
        %1595 = vmatmul.mubr.bf16.gmra.mrb[0].mxu0 %v1560
        %v1596 = vpop.f32.mrb[0].mxu0
        %v1597 = vadd.f32 0.0, %v1596
        %v1598 = vpop.f32.mrb[0].mxu0
        %v1599 = vpop.f32.mrb[0].mxu0
        %v1600 = vpop.f32.mrb[0].mxu0
        %1601 = vdwg.mxu0
        %1602 = vrot.lane.b32.xlu0 %v1003, 80
        %v1603 = vpop.permute.xlu0 %1602
        %v1606 = vsel %vm1097, %v1555, 0
        %1608 = vmatprep.subr.bf16.mxu0 0
        %1609 = vmatpush1.bf16.msra.mxu0 %v1603
        %1610 = vmatprep.subr.bf16.mxu0 0
        %1611 = vmatpush1.bf16.msra.mxu0 0
        %1612 = vmatprep.subr.bf16.mxu0 0
        %1613 = vmatpush1.bf16.msra.mxu0 0
        %1614 = vmatprep.subr.bf16.mxu0 0
        %1615 = vmatpush1.bf16.msra.mxu0 0
        %1616 = vmatprep.subr.bf16.mxu0 0
        %1617 = vmatpush1.bf16.msra.mxu0 0
        %1618 = vmatprep.subr.bf16.mxu0 0
        %1619 = vmatpush1.bf16.msra.mxu0 0
        %1620 = vmatprep.subr.bf16.mxu0 0
        %1621 = vmatpush1.bf16.msra.mxu0 0
        %1622 = vmatprep.subr.bf16.mxu0 0
        %1623 = vmatpush1.bf16.msra.mxu0 0
        %1624 = vmatprep.subr.bf16.mxu0 0
        %1625 = vmatpush1.bf16.msra.mxu0 0
        %1626 = vmatprep.subr.bf16.mxu0 0
        %1627 = vmatpush1.bf16.msra.mxu0 0
        %1628 = vmatprep.subr.bf16.mxu0 0
        %1629 = vmatpush1.bf16.msra.mxu0 0
        %1630 = vmatprep.subr.bf16.mxu0 0
        %1631 = vmatpush1.bf16.msra.mxu0 0
        %1632 = vmatprep.subr.bf16.mxu0 0
        %1633 = vmatpush1.bf16.msra.mxu0 0
        %1634 = vmatprep.subr.bf16.mxu0 0
        %1635 = vmatpush1.bf16.msra.mxu0 0
        %1636 = vmatprep.subr.bf16.mxu0 0
        %1637 = vmatpush1.bf16.msra.mxu0 0
        %1638 = vmatprep.subr.bf16.mxu0 0
        %1639 = vmatpush1.bf16.msra.mxu0 0
        %1640 = vmatprep.mubr.bf16.mxu0 0
        %1641 = vmatmul.mubr.bf16.gmra.mrb[0].mxu0 %v1606
        %v1642 = vpop.f32.mrb[0].mxu0
        %v1643 = vadd.f32 0.0, %v1642
        %v1644 = vpop.f32.mrb[0].mxu0
        %v1645 = vpop.f32.mrb[0].mxu0
        %v1646 = vpop.f32.mrb[0].mxu0
        %1647 = vdwg.mxu0
        %1648 = vrot.lane.b32.xlu0 %v1000, 104
        %v1649 = vpop.permute.xlu0 %1648
        %1650 = vrot.lane.b32.xlu0 %v1002, 104
        %v1651 = vpop.permute.xlu0 %1650
        %v1653 = vsel %vm1004, %v1649, 0
        %v1656 = vsel %vm1004, %v1651, 0
        %1658 = vmatprep.subr.bf16.mxu0 0
        %1659 = vmatpush1.bf16.xpose.msra.mxu0 %v1656
        %1660 = vmatprep.subr.bf16.mxu0 0
        %1661 = vmatpush1.bf16.xpose.msra.mxu0 0
        %1662 = vmatprep.subr.bf16.mxu0 0
        %1663 = vmatpush1.bf16.xpose.msra.mxu0 0
        %1664 = vmatprep.subr.bf16.mxu0 0
        %1665 = vmatpush1.bf16.xpose.msra.mxu0 0
        %1666 = vmatprep.subr.bf16.mxu0 0
        %1667 = vmatpush1.bf16.xpose.msra.mxu0 0
        %1668 = vmatprep.subr.bf16.mxu0 0
        %1669 = vmatpush1.bf16.xpose.msra.mxu0 0
        %1670 = vmatprep.subr.bf16.mxu0 0
        %1671 = vmatpush1.bf16.xpose.msra.mxu0 0
        %1672 = vmatprep.subr.bf16.mxu0 0
        %1673 = vmatpush1.bf16.xpose.msra.mxu0 0
        %1674 = vmatprep.subr.bf16.mxu0 0
        %1675 = vmatpush1.bf16.xpose.msra.mxu0 0
        %1676 = vmatprep.subr.bf16.mxu0 0
        %1677 = vmatpush1.bf16.xpose.msra.mxu0 0
        %1678 = vmatprep.subr.bf16.mxu0 0
        %1679 = vmatpush1.bf16.xpose.msra.mxu0 0
        %1680 = vmatprep.subr.bf16.mxu0 0
        %1681 = vmatpush1.bf16.xpose.msra.mxu0 0
        %1682 = vmatprep.subr.bf16.mxu0 0
        %1683 = vmatpush1.bf16.xpose.msra.mxu0 0
        %1684 = vmatprep.subr.bf16.mxu0 0
        %1685 = vmatpush1.bf16.xpose.msra.mxu0 0
        %1686 = vmatprep.subr.bf16.mxu0 0
        %1687 = vmatpush1.bf16.xpose.msra.mxu0 0
        %1688 = vmatprep.subr.bf16.mxu0 0
        %1689 = vmatpush1.bf16.xpose.msra.mxu0 0
        %1690 = vmatprep.mubr.bf16.mxu0 0
        %1691 = vmatmul.mubr.bf16.gmra.mrb[0].mxu0 %v1653
        %v1692 = vpop.f32.mrb[0].mxu0
        %v1693 = vadd.f32 0.0, %v1692
        %v1694 = vpop.f32.mrb[0].mxu0
        %v1695 = vpop.f32.mrb[0].mxu0
        %v1696 = vpop.f32.mrb[0].mxu0
        %1697 = vdwg.mxu0
        %1698 = vrot.lane.b32.xlu0 %v1001, 104
        %v1699 = vpop.permute.xlu0 %1698
        %1700 = vrot.lane.b32.xlu0 %v1003, 104
        %v1701 = vpop.permute.xlu0 %1700
        %v1703 = vsel %vm1004, %v1699, 0
        %v1706 = vsel %vm1004, %v1701, 0
        %1708 = vmatprep.subr.bf16.mxu0 0
        %1709 = vmatpush1.bf16.xpose.msra.mxu0 %v1706
        %1710 = vmatprep.subr.bf16.mxu0 0
        %1711 = vmatpush1.bf16.xpose.msra.mxu0 0
        %1712 = vmatprep.subr.bf16.mxu0 0
        %1713 = vmatpush1.bf16.xpose.msra.mxu0 0
        %1714 = vmatprep.subr.bf16.mxu0 0
        %1715 = vmatpush1.bf16.xpose.msra.mxu0 0
        %1716 = vmatprep.subr.bf16.mxu0 0
        %1717 = vmatpush1.bf16.xpose.msra.mxu0 0
        %1718 = vmatprep.subr.bf16.mxu0 0
        %1719 = vmatpush1.bf16.xpose.msra.mxu0 0
        %1720 = vmatprep.subr.bf16.mxu0 0
        %1721 = vmatpush1.bf16.xpose.msra.mxu0 0
        %1722 = vmatprep.subr.bf16.mxu0 0
        %1723 = vmatpush1.bf16.xpose.msra.mxu0 0
        %1724 = vmatprep.subr.bf16.mxu0 0
        %1725 = vmatpush1.bf16.xpose.msra.mxu0 0
        %1726 = vmatprep.subr.bf16.mxu0 0
        %1727 = vmatpush1.bf16.xpose.msra.mxu0 0
        %1728 = vmatprep.subr.bf16.mxu0 0
        %1729 = vmatpush1.bf16.xpose.msra.mxu0 0
        %1730 = vmatprep.subr.bf16.mxu0 0
        %1731 = vmatpush1.bf16.xpose.msra.mxu0 0
        %1732 = vmatprep.subr.bf16.mxu0 0
        %1733 = vmatpush1.bf16.xpose.msra.mxu0 0
        %1734 = vmatprep.subr.bf16.mxu0 0
        %1735 = vmatpush1.bf16.xpose.msra.mxu0 0
        %1736 = vmatprep.subr.bf16.mxu0 0
        %1737 = vmatpush1.bf16.xpose.msra.mxu0 0
        %1738 = vmatprep.subr.bf16.mxu0 0
        %1739 = vmatpush1.bf16.xpose.msra.mxu0 0
        %1740 = vmatprep.mubr.bf16.mxu0 0
        %1741 = vmatmul.mubr.bf16.gmra.mrb[0].mxu0 %v1703
        %v1742 = vpop.f32.mrb[0].mxu0
        %v1743 = vadd.f32 0.0, %v1742
        %v1744 = vpop.f32.mrb[0].mxu0
        %v1745 = vpop.f32.mrb[0].mxu0
        %v1746 = vpop.f32.mrb[0].mxu0
        %1747 = vdwg.mxu0
        %v1748 = vsel %vm1097, %v1693, -inf
        %1749 = vmax.xlane.f32.xlu0 %v1748
        %v1750 = vpop.xlane.xlu0 %1749
        %v1751 = vsel %vm1097, %v1743, -inf
        %1752 = vmax.xlane.f32.xlu0 %v1751
        %v1753 = vpop.xlane.xlu0 %1752
        %v1754 = vsub.f32 %v1693, %v1750
        %v1755 = vsub.f32 %v1743, %v1753
        %v1756 = vmul.f32 %v1754, 1.442695
        %v1757 = vpow.pop %v1756
        %v1758 = vmul.f32 %v1755, 1.442695
        %v1759 = vpow.pop %v1758
        %v1760 = vsel %vm1097, %v1757, 0.0
        %1761 = vadd.xlane.f32.xlu0 %v1760
        %v1762 = vpop.xlane.xlu0 %1761
        %v1763 = vsel %vm1097, %v1759, 0.0
        %1764 = vadd.xlane.f32.xlu0 %v1763
        %v1765 = vpop.xlane.xlu0 %1764
        %v1766 = vrcp.pop %v1762
        %v1767 = vrcp.pop %v1765
        %v1768 = vmul.f32 %v1757, %v1766
        %v1769 = vmul.f32 %v1759, %v1767
        %v1770 = vpack.c.bf16 %v1768, %v1768
        %v1771 = vpack.c.bf16 %v1769, %v1769
        %1772 = vrot.lane.b32.xlu0 %v1002, 72
        %v1773 = vpop.permute.xlu0 %1772
        %v1776 = vsel %vm1097, %v1770, 0
        %1778 = vmatprep.subr.bf16.mxu0 0
        %1779 = vmatpush1.bf16.msra.mxu0 %v1773
        %1780 = vmatprep.subr.bf16.mxu0 0
        %1781 = vmatpush1.bf16.msra.mxu0 0
        %1782 = vmatprep.subr.bf16.mxu0 0
        %1783 = vmatpush1.bf16.msra.mxu0 0
        %1784 = vmatprep.subr.bf16.mxu0 0
        %1785 = vmatpush1.bf16.msra.mxu0 0
        %1786 = vmatprep.subr.bf16.mxu0 0
        %1787 = vmatpush1.bf16.msra.mxu0 0
        %1788 = vmatprep.subr.bf16.mxu0 0
        %1789 = vmatpush1.bf16.msra.mxu0 0
        %1790 = vmatprep.subr.bf16.mxu0 0
        %1791 = vmatpush1.bf16.msra.mxu0 0
        %1792 = vmatprep.subr.bf16.mxu0 0
        %1793 = vmatpush1.bf16.msra.mxu0 0
        %1794 = vmatprep.subr.bf16.mxu0 0
        %1795 = vmatpush1.bf16.msra.mxu0 0
        %1796 = vmatprep.subr.bf16.mxu0 0
        %1797 = vmatpush1.bf16.msra.mxu0 0
        %1798 = vmatprep.subr.bf16.mxu0 0
        %1799 = vmatpush1.bf16.msra.mxu0 0
        %1800 = vmatprep.subr.bf16.mxu0 0
        %1801 = vmatpush1.bf16.msra.mxu0 0
        %1802 = vmatprep.subr.bf16.mxu0 0
        %1803 = vmatpush1.bf16.msra.mxu0 0
        %1804 = vmatprep.subr.bf16.mxu0 0
        %1805 = vmatpush1.bf16.msra.mxu0 0
        %1806 = vmatprep.subr.bf16.mxu0 0
        %1807 = vmatpush1.bf16.msra.mxu0 0
        %1808 = vmatprep.subr.bf16.mxu0 0
        %1809 = vmatpush1.bf16.msra.mxu0 0
        %1810 = vmatprep.mubr.bf16.mxu0 0
        %1811 = vmatmul.mubr.bf16.gmra.mrb[0].mxu0 %v1776
        %v1812 = vpop.f32.mrb[0].mxu0
        %v1813 = vadd.f32 0.0, %v1812
        %v1814 = vpop.f32.mrb[0].mxu0
        %v1815 = vpop.f32.mrb[0].mxu0
        %v1816 = vpop.f32.mrb[0].mxu0
        %1817 = vdwg.mxu0
        %1818 = vrot.lane.b32.xlu0 %v1003, 72
        %v1819 = vpop.permute.xlu0 %1818
        %v1822 = vsel %vm1097, %v1771, 0
        %1824 = vmatprep.subr.bf16.mxu0 0
        %1825 = vmatpush1.bf16.msra.mxu0 %v1819
        %1826 = vmatprep.subr.bf16.mxu0 0
        %1827 = vmatpush1.bf16.msra.mxu0 0
        %1828 = vmatprep.subr.bf16.mxu0 0
        %1829 = vmatpush1.bf16.msra.mxu0 0
        %1830 = vmatprep.subr.bf16.mxu0 0
        %1831 = vmatpush1.bf16.msra.mxu0 0
        %1832 = vmatprep.subr.bf16.mxu0 0
        %1833 = vmatpush1.bf16.msra.mxu0 0
        %1834 = vmatprep.subr.bf16.mxu0 0
        %1835 = vmatpush1.bf16.msra.mxu0 0
        %1836 = vmatprep.subr.bf16.mxu0 0
        %1837 = vmatpush1.bf16.msra.mxu0 0
        %1838 = vmatprep.subr.bf16.mxu0 0
        %1839 = vmatpush1.bf16.msra.mxu0 0
        %1840 = vmatprep.subr.bf16.mxu0 0
        %1841 = vmatpush1.bf16.msra.mxu0 0
        %1842 = vmatprep.subr.bf16.mxu0 0
        %1843 = vmatpush1.bf16.msra.mxu0 0
        %1844 = vmatprep.subr.bf16.mxu0 0
        %1845 = vmatpush1.bf16.msra.mxu0 0
        %1846 = vmatprep.subr.bf16.mxu0 0
        %1847 = vmatpush1.bf16.msra.mxu0 0
        %1848 = vmatprep.subr.bf16.mxu0 0
        %1849 = vmatpush1.bf16.msra.mxu0 0
        %1850 = vmatprep.subr.bf16.mxu0 0
        %1851 = vmatpush1.bf16.msra.mxu0 0
        %1852 = vmatprep.subr.bf16.mxu0 0
        %1853 = vmatpush1.bf16.msra.mxu0 0
        %1854 = vmatprep.subr.bf16.mxu0 0
        %1855 = vmatpush1.bf16.msra.mxu0 0
        %1856 = vmatprep.mubr.bf16.mxu0 0
        %1857 = vmatmul.mubr.bf16.gmra.mrb[0].mxu0 %v1822
        %v1858 = vpop.f32.mrb[0].mxu0
        %v1859 = vadd.f32 0.0, %v1858
        %v1860 = vpop.f32.mrb[0].mxu0
        %v1861 = vpop.f32.mrb[0].mxu0
        %v1862 = vpop.f32.mrb[0].mxu0
        %1863 = vdwg.mxu0
        %1866 = vrot.lane.b32.xlu0 %v1381, 8
        %v1867 = vpop.permute.xlu0 %1866
        %1868 = vrot.lane.b32.xlu0 %v1427, 8
        %v1869 = vpop.permute.xlu0 %1868
        %1874 = vrot.lane.b32.xlu0 %v1597, 16
        %v1875 = vpop.permute.xlu0 %1874
        %1876 = vrot.lane.b32.xlu0 %v1643, 16
        %v1877 = vpop.permute.xlu0 %1876
        %1882 = vrot.lane.b32.xlu0 %v1813, 24
        %v1883 = vpop.permute.xlu0 %1882
        %1884 = vrot.lane.b32.xlu0 %v1859, 24
        %v1885 = vpop.permute.xlu0 %1884
        %v1888 = vsel %vm1004, %v1164, %v1867
        %v1889 = vsel %vm1004, %v1211, %v1869
        %v1890 = vsel %vm1097, %v1888, %v1875
        %v1891 = vsel %vm1097, %v1889, %v1877
        %vm1892 = vcmask 195584
        %v1893 = vsel %vm1892, %v1890, %v1883
        %v1894 = vsel %vm1892, %v1891, %v1885
        %v1895 = vpack.c.bf16 %v1894, %v1893
        %v1896 = vld [vmem:[%s9] sm:$0xf]
        %v1897 = vld [vmem:[%s9 + $0x4] sm:$0xf]
        %v1898 = vld [vmem:[%s9 + $0x8] sm:$0xf]
        %v1899 = vld [vmem:[%s9 + $0xc] sm:$0xf]
        %v1900 = vld [vmem:[#allocation13] sm:$0x1]
        %v1902 = vlaneseq
        %v1903 = vshrl.u32 %v1902, 7
        %v1904 = vsub.s32 0, %v1903
        %v1905 = vrot.slane %v1900, %v1904
        %v1911 = vunpack.c.l.b16 %v1896
        %v1912 = vunpack.c.l.b16 %v1897
        %v1913 = vunpack.c.l.b16 %v1898
        %v1914 = vunpack.c.l.b16 %v1899
        %v1915 = vpack.c.b16 %v1912, %v1911
        %v1916 = vpack.c.b16 %v1914, %v1913
        %v1920 = vsel %vm796, %v1895, 0
        %1922 = vmatprep.subr.bf16.mxu0 0
        %1923 = vmatpush1.bf16.msra.mxu0 %v1915
        %1924 = vmatprep.subr.bf16.mxu0 0
        %1925 = vmatpush1.bf16.msra.mxu0 %v1916
        %1926 = vmatprep.subr.bf16.mxu0 0
        %1927 = vmatpush1.bf16.msra.mxu0 0
        %1928 = vmatprep.subr.bf16.mxu0 0
        %1929 = vmatpush1.bf16.msra.mxu0 0
        %1930 = vmatprep.subr.bf16.mxu0 0
        %1931 = vmatpush1.bf16.msra.mxu0 0
        %1932 = vmatprep.subr.bf16.mxu0 0
        %1933 = vmatpush1.bf16.msra.mxu0 0
        %1934 = vmatprep.subr.bf16.mxu0 0
        %1935 = vmatpush1.bf16.msra.mxu0 0
        %1936 = vmatprep.subr.bf16.mxu0 0
        %1937 = vmatpush1.bf16.msra.mxu0 0
        %1938 = vmatprep.subr.bf16.mxu0 0
        %1939 = vmatpush1.bf16.msra.mxu0 0
        %1940 = vmatprep.subr.bf16.mxu0 0
        %1941 = vmatpush1.bf16.msra.mxu0 0
        %1942 = vmatprep.subr.bf16.mxu0 0
        %1943 = vmatpush1.bf16.msra.mxu0 0
        %1944 = vmatprep.subr.bf16.mxu0 0
        %1945 = vmatpush1.bf16.msra.mxu0 0
        %1946 = vmatprep.subr.bf16.mxu0 0
        %1947 = vmatpush1.bf16.msra.mxu0 0
        %1948 = vmatprep.subr.bf16.mxu0 0
        %1949 = vmatpush1.bf16.msra.mxu0 0
        %1950 = vmatprep.subr.bf16.mxu0 0
        %1951 = vmatpush1.bf16.msra.mxu0 0
        %1952 = vmatprep.subr.bf16.mxu0 0
        %1953 = vmatpush1.bf16.msra.mxu0 0
        %1954 = vmatprep.mubr.bf16.mxu0 0
        %1955 = vmatmul.mubr.bf16.gmra.mrb[0].mxu0 %v1920
        %v1956 = vpop.f32.mrb[0].mxu0
        %v1957 = vadd.f32 %v1905, %v1956
        %v1958 = vpop.f32.mrb[0].mxu0
        %v1959 = vpop.f32.mrb[0].mxu0
        %v1960 = vadd.f32 %v1905, %v1959
        %v1961 = vpop.f32.mrb[0].mxu0
        %1962 = vdwg.mxu0
        %v1963 = vadd.f32 %v840, %v1957
        %v1964 = vadd.f32 %v841, %v1960
        %v1965 = vsel %vm796, %v1963, 0.0
        %1966 = vadd.xlane.f32.xlu0 %v1965
        %v1967 = vpop.xlane.xlu0 %1966
        %v1968 = vsel %vm796, %v1964, 0.0
        %1969 = vadd.xlane.f32.xlu0 %v1968
        %v1970 = vpop.xlane.xlu0 %1969
        %v1971 = vmul.f32 %v1967, %v803
        %v1972 = vmul.f32 %v1970, %v803
        %v1973 = vsub.f32 %v1963, %v1971
        %v1974 = vsub.f32 %v1964, %v1972
        %v1975 = vmul.f32 %v1973, %v1973
        %v1976 = vmul.f32 %v1974, %v1974
        %v1977 = vsel %vm796, %v1975, 0.0
        %1978 = vadd.xlane.f32.xlu0 %v1977
        %v1979 = vpop.xlane.xlu0 %1978
        %v1980 = vsel %vm796, %v1976, 0.0
        %1981 = vadd.xlane.f32.xlu0 %v1980
        %v1982 = vpop.xlane.xlu0 %1981
        %v1983 = vmul.f32 %v1979, %v803
        %v1984 = vmul.f32 %v1982, %v803
        %v1985 = vadd.f32 %v1983, 1e-05
        %v1986 = vadd.f32 %v1984, 1e-05
        %v1987 = vrsqrt.pop %v1985
        %v1988 = vrsqrt.pop %v1986
        %v1989 = vmul.f32 %v1973, %v1987
        %v1990 = vmul.f32 %v1974, %v1988
        %v1991 = vld [vmem:[#allocation14] sm:$0x1]
        %v1993 = vlaneseq
        %v1994 = vshrl.u32 %v1993, 7
        %v1995 = vsub.s32 0, %v1994
        %v1996 = vrot.slane %v1991, %v1995
        %v1998 = vmul.f32 %v1989, %v1996
        %v1999 = vmul.f32 %v1990, %v1996
        %v2000 = vld [vmem:[#allocation16] sm:$0x1]
        %v2002 = vlaneseq
        %v2003 = vshrl.u32 %v2002, 7
        %v2004 = vsub.s32 0, %v2003
        %v2005 = vrot.slane %v2000, %v2004
        %v2007 = vadd.f32 %v1998, %v2005
        %v2008 = vadd.f32 %v1999, %v2005
        %v2009 = vpack.c.bf16 %v2008, %v2007
        %v2010 = vld [vmem:[%s13] sm:$0xf]
        %v2011 = vld [vmem:[%s13 + $0x4] sm:$0xf]
        %v2012 = vld [vmem:[%s13 + $0x8] sm:$0xf]
        %v2013 = vld [vmem:[%s13 + $0xc] sm:$0xf]
        %v2014 = vld [vmem:[%s14] sm:$0x1]
        %v2016 = vlaneseq
        %v2017 = vshrl.u32 %v2016, 7
        %v2018 = vsub.s32 0, %v2017
        %v2019 = vrot.slane %v2014, %v2018
        %v2025 = vunpack.c.l.b16 %v2010
        %v2026 = vunpack.c.l.b16 %v2011
        %v2027 = vunpack.c.l.b16 %v2012
        %v2028 = vunpack.c.l.b16 %v2013
        %v2029 = vpack.c.b16 %v2026, %v2025
        %v2030 = vpack.c.b16 %v2028, %v2027
        %v2034 = vsel %vm796, %v2009, 0
        %2036 = vmatprep.subr.bf16.mxu0 0
        %2037 = vmatpush1.bf16.msra.mxu0 %v2029
        %2038 = vmatprep.subr.bf16.mxu0 0
        %2039 = vmatpush1.bf16.msra.mxu0 %v2030
        %2040 = vmatprep.subr.bf16.mxu0 0
        %2041 = vmatpush1.bf16.msra.mxu0 0
        %2042 = vmatprep.subr.bf16.mxu0 0
        %2043 = vmatpush1.bf16.msra.mxu0 0
        %2044 = vmatprep.subr.bf16.mxu0 0
        %2045 = vmatpush1.bf16.msra.mxu0 0
        %2046 = vmatprep.subr.bf16.mxu0 0
        %2047 = vmatpush1.bf16.msra.mxu0 0
        %2048 = vmatprep.subr.bf16.mxu0 0
        %2049 = vmatpush1.bf16.msra.mxu0 0
        %2050 = vmatprep.subr.bf16.mxu0 0
        %2051 = vmatpush1.bf16.msra.mxu0 0
        %2052 = vmatprep.subr.bf16.mxu0 0
        %2053 = vmatpush1.bf16.msra.mxu0 0
        %2054 = vmatprep.subr.bf16.mxu0 0
        %2055 = vmatpush1.bf16.msra.mxu0 0
        %2056 = vmatprep.subr.bf16.mxu0 0
        %2057 = vmatpush1.bf16.msra.mxu0 0
        %2058 = vmatprep.subr.bf16.mxu0 0
        %2059 = vmatpush1.bf16.msra.mxu0 0
        %2060 = vmatprep.subr.bf16.mxu0 0
        %2061 = vmatpush1.bf16.msra.mxu0 0
        %2062 = vmatprep.subr.bf16.mxu0 0
        %2063 = vmatpush1.bf16.msra.mxu0 0
        %2064 = vmatprep.subr.bf16.mxu0 0
        %2065 = vmatpush1.bf16.msra.mxu0 0
        %2066 = vmatprep.subr.bf16.mxu0 0
        %2067 = vmatpush1.bf16.msra.mxu0 0
        %2068 = vmatprep.mubr.bf16.mxu0 0
        %2069 = vmatmul.mubr.bf16.gmra.mrb[0].mxu0 %v2034
        %v2070 = vpop.f32.mrb[0].mxu0
        %v2071 = vadd.f32 %v2019, %v2070
        %v2072 = vpop.f32.mrb[0].mxu0
        %v2073 = vpop.f32.mrb[0].mxu0
        %v2074 = vadd.f32 %v2019, %v2073
        %v2075 = vpop.f32.mrb[0].mxu0
        %2076 = vdwg.mxu0
        %v2077 = vmax.f32 %v2071, 0.0
        %v2078 = vmax.f32 %v2074, 0.0
        %v2079 = vpack.c.bf16 %v2078, %v2077
        %v2080 = vld [vmem:[%s15] sm:$0xf]
        %v2081 = vld [vmem:[%s15 + $0x4] sm:$0xf]
        %v2082 = vld [vmem:[%s15 + $0x8] sm:$0xf]
        %v2083 = vld [vmem:[%s15 + $0xc] sm:$0xf]
        %v2084 = vld [vmem:[%s15 + $0x10] sm:$0xf]
        %v2085 = vld [vmem:[%s15 + $0x14] sm:$0xf]
        %v2086 = vld [vmem:[%s15 + $0x18] sm:$0xf]
        %v2087 = vld [vmem:[%s15 + $0x1c] sm:$0xf]
        %v2088 = vld [vmem:[%s16] sm:$0x1]
        %v2090 = vlaneseq
        %v2091 = vshrl.u32 %v2090, 7
        %v2092 = vsub.s32 0, %v2091
        %v2093 = vrot.slane %v2088, %v2092
        %v2103 = vunpack.c.l.b16 %v2080
        %v2104 = vunpack.c.l.b16 %v2081
        %v2105 = vunpack.c.l.b16 %v2082
        %v2106 = vunpack.c.l.b16 %v2083
        %v2107 = vunpack.c.l.b16 %v2084
        %v2108 = vunpack.c.l.b16 %v2085
        %v2109 = vunpack.c.l.b16 %v2086
        %v2110 = vunpack.c.l.b16 %v2087
        %v2111 = vpack.c.b16 %v2104, %v2103
        %v2112 = vpack.c.b16 %v2106, %v2105
        %v2113 = vpack.c.b16 %v2108, %v2107
        %v2114 = vpack.c.b16 %v2110, %v2109
        %vm2119 = vcmask 523264
        %v2121 = vsel %vm2119, %v2079, 0
        %2123 = vmatprep.subr.bf16.mxu0 0
        %2124 = vmatpush1.bf16.msra.mxu0 %v2111
        %2125 = vmatprep.subr.bf16.mxu0 0
        %2126 = vmatpush1.bf16.msra.mxu0 %v2112
        %2127 = vmatprep.subr.bf16.mxu0 0
        %2128 = vmatpush1.bf16.msra.mxu0 %v2113
        %2129 = vmatprep.subr.bf16.mxu0 0
        %2130 = vmatpush1.bf16.msra.mxu0 %v2114
        %2131 = vmatprep.subr.bf16.mxu0 0
        %2132 = vmatpush1.bf16.msra.mxu0 0
        %2133 = vmatprep.subr.bf16.mxu0 0
        %2134 = vmatpush1.bf16.msra.mxu0 0
        %2135 = vmatprep.subr.bf16.mxu0 0
        %2136 = vmatpush1.bf16.msra.mxu0 0
        %2137 = vmatprep.subr.bf16.mxu0 0
        %2138 = vmatpush1.bf16.msra.mxu0 0
        %2139 = vmatprep.subr.bf16.mxu0 0
        %2140 = vmatpush1.bf16.msra.mxu0 0
        %2141 = vmatprep.subr.bf16.mxu0 0
        %2142 = vmatpush1.bf16.msra.mxu0 0
        %2143 = vmatprep.subr.bf16.mxu0 0
        %2144 = vmatpush1.bf16.msra.mxu0 0
        %2145 = vmatprep.subr.bf16.mxu0 0
        %2146 = vmatpush1.bf16.msra.mxu0 0
        %2147 = vmatprep.subr.bf16.mxu0 0
        %2148 = vmatpush1.bf16.msra.mxu0 0
        %2149 = vmatprep.subr.bf16.mxu0 0
        %2150 = vmatpush1.bf16.msra.mxu0 0
        %2151 = vmatprep.subr.bf16.mxu0 0
        %2152 = vmatpush1.bf16.msra.mxu0 0
        %2153 = vmatprep.subr.bf16.mxu0 0
        %2154 = vmatpush1.bf16.msra.mxu0 0
        %2155 = vmatprep.mubr.bf16.mxu0 0
        %2156 = vmatmul.mubr.bf16.gmra.mrb[0].mxu0 %v2121
        %v2157 = vpop.f32.mrb[0].mxu0
        %v2158 = vadd.f32 %v2093, %v2157
        %v2159 = vpop.f32.mrb[0].mxu0
        %v2160 = vpop.f32.mrb[0].mxu0
        %v2161 = vadd.f32 %v2093, %v2160
        %v2162 = vpop.f32.mrb[0].mxu0
        %2163 = vdwg.mxu0
        %v2164 = vadd.f32 %v2007, %v2158
        %v2165 = vadd.f32 %v2008, %v2161
        %v2166 = vsel %vm796, %v2164, 0.0
        %2167 = vadd.xlane.f32.xlu0 %v2166
        %v2168 = vpop.xlane.xlu0 %2167
        %v2169 = vsel %vm796, %v2165, 0.0
        %2170 = vadd.xlane.f32.xlu0 %v2169
        %v2171 = vpop.xlane.xlu0 %2170
        %v2172 = vmul.f32 %v2168, %v803
        %v2173 = vmul.f32 %v2171, %v803
        %v2174 = vsub.f32 %v2164, %v2172
        %v2175 = vsub.f32 %v2165, %v2173
        %v2176 = vmul.f32 %v2174, %v2174
        %v2177 = vmul.f32 %v2175, %v2175
        %v2178 = vsel %vm796, %v2176, 0.0
        %2179 = vadd.xlane.f32.xlu0 %v2178
        %v2180 = vpop.xlane.xlu0 %2179
        %v2181 = vsel %vm796, %v2177, 0.0
        %2182 = vadd.xlane.f32.xlu0 %v2181
        %v2183 = vpop.xlane.xlu0 %2182
        %v2184 = vmul.f32 %v2180, %v803
        %v2185 = vmul.f32 %v2183, %v803
        %v2186 = vadd.f32 %v2184, 1e-05
        %v2187 = vadd.f32 %v2185, 1e-05
        %v2188 = vrsqrt.pop %v2186
        %v2189 = vrsqrt.pop %v2187
        %v2190 = vmul.f32 %v2174, %v2188
        %v2191 = vmul.f32 %v2175, %v2189
        %v2192 = vld [vmem:[%s17] sm:$0x1]
        %v2194 = vlaneseq
        %v2195 = vshrl.u32 %v2194, 7
        %v2196 = vsub.s32 0, %v2195
        %v2197 = vrot.slane %v2192, %v2196
        %v2199 = vmul.f32 %v2190, %v2197
        %v2200 = vmul.f32 %v2191, %v2197
        %v2201 = vld [vmem:[%s18] sm:$0x1]
        %v2203 = vlaneseq
        %v2204 = vshrl.u32 %v2203, 7
        %v2205 = vsub.s32 0, %v2204
        %v2206 = vrot.slane %v2201, %v2205
        %v2208 = vadd.f32 %v2199, %v2206
        %v2209 = vadd.f32 %v2200, %v2206
        %2210 = vst.msk [vmem:[%s739] sm:$0xff] %vm796, %v2208
        %2211 = vst.msk [vmem:[%s739 + $0x8] sm:$0xff] %vm796, %v2209
        %s2212 = sand.u32 %s457, 1
        %s2213 = scalar_lea.sflag [#allocation4], %s2212
        %s2214 = sand.u32 %s457, 1
        %s2215 = smul.addr %s2214, 16
        %s2216 = scalar_lea.vmem [#allocation17], %s2215
        // Predicated region
        $region133: #{tpu_custom_call.1} parent=95 // pred_check
          %p2217 = pneg %p467
        $region134: #{tpu_custom_call.1} parent=95 // pred_check_branch
          %2219 = sbr.rel (%p2217) target = $region136
        $region135: #{tpu_custom_call.1} parent=95 // pred_region
          %s2220 = smul.u32 2, %s40
          %s2222 = ssub.s32 256, 256
          %2223 = vsyncadd %s2213, %s2222
          %s2224 = smul.addr %s2220, 128
          %s2225 = scalar_lea.hbm %s19, %s2224
          %s2226 = sshll.u32 %s2216, 4
          %s2227 = int_to_ptr.vmem [resolvable:$true] %s2226
          %2232 = dma.vmem_to_hbm [thread:$0]  %s2227, 256, %s2225, %s2213, 128, 128, 8
        $region136: #{tpu_custom_call.1} parent=95 // pred_fallthru
          _
      $region96: #{tpu_custom_call.1} parent=5 // pred_fallthru
        _
      %p2233 = scmp.le.s32.totalorder 2, %s35
      // Predicated region
      $region137: #{tpu_custom_call.1} parent=5 // pred_check
        %p2234 = pneg %p2233
      $region138: #{tpu_custom_call.1} parent=5 // pred_check_branch
        %2236 = sbr.rel (%p2234) target = $region140
      $region139: #{tpu_custom_call.1} parent=5 // pred_region
        %s2237 = ssub.s32 %s35, 2
        // Predicated region
        $region141: #{tpu_custom_call.1} parent=139 // pred_check
          %p2238 = pneg %p473
        $region142: #{tpu_custom_call.1} parent=139 // pred_check_branch
          %2240 = sbr.rel (%p2238) target = $region144
        $region143: #{tpu_custom_call.1} parent=139 // pred_region
          %s2241 = sand.u32 %s458, 1
          %s2242 = scalar_lea.sflag [#allocation4], %s2241
          %s2243 = sand.u32 %s458, 1
          %s2244 = smul.addr %s2243, 16
          %s2245 = scalar_lea.vmem [#allocation17], %s2244
          %2246 = dma.done %s2242, 256
        $region144: #{tpu_custom_call.1} parent=139 // pred_fallthru
          _
      $region140: #{tpu_custom_call.1} parent=5 // pred_fallthru
        _
    $region6: #{tpu_custom_call.1} parent=1 // loop_footer
      %s39 = sadd.s32 1, %s35
    $region7: #{tpu_custom_call.1} parent=1 // loop_footer_branch
      %34 = sbr.rel target = $region3
    $region8: #{tpu_custom_call.1} parent=1 // loop_exit
      _
    %2247 = vsyncpa [#allocation3], 1
    %s2248 = scalar_lea.sflag [#allocation3], 1
    %2249 = vsyncpa %s2248, 1
    %2250 = vsyncpa [#allocation6], 1
    %2251 = vsyncpa [#allocation9], 1
    %2252 = vsyncpa [#allocation12], 1
    %2253 = vsyncpa [#allocation15], 1
    %2254 = vsyncpa [#allocation4], 1
    %s2255 = scalar_lea.sflag [#allocation4], 1
    %2256 = vsyncpa %s2255, 1

</llo_original>
